<compile_context>
chip_gen: v5e
topology: v5e:2x2
jax: 0.10.0
libtpu: 0.0.40
codegen_flags: <defaults>
</compile_context>

<pallas_src>
import jax
import jax.numpy as jnp
from jax.experimental import pallas as pl
from jax.experimental.pallas import tpu as pltpu


def lstm_fused_kernel(x_ref, wih_ref, whh_ref, b_ref, h0_ref, c0_ref,
                      out_ref, hn_ref, cn_ref,
                      h_scr, c_scr, xg_scr):
    """Full-sequence LSTM in a single invocation.

    x_ref  : (T*B, D)   compute dtype (bf16 or f32)
    wih_ref: (D, 4H)    compute dtype
    whh_ref: (H, 4H)    compute dtype
    b_ref  : (1, 4H)    f32
    h0/c0  : (B, H)
    out_ref: (T*B, H)
    hn/cn  : (B, H)
    h_scr/c_scr: (B, H) f32 state carry
    xg_scr : (T*B, 4H)  f32 pre-computed input projection
    """
    TB, _ = x_ref.shape
    B, H = h0_ref.shape
    T = TB // B

    # ---- Phase 1: hoisted (non-recurrent) input projection, one big matmul.
    xg_scr[...] = (
        jnp.dot(x_ref[...], wih_ref[...], preferred_element_type=jnp.float32)
        + b_ref[...]
    )

    # ---- Phase 2: sequential recurrence; state carried in f32 VMEM scratch.
    h_scr[...] = h0_ref[...].astype(jnp.float32)
    c_scr[...] = c0_ref[...].astype(jnp.float32)

    w_hh = whh_ref[...]  # resident for the whole loop

    def step(t, carry):
        h = h_scr[...]
        c = c_scr[...]
        row = pl.multiple_of(t * B, B)

        gates = (
            xg_scr[pl.ds(row, B), :]
            + jnp.dot(h.astype(w_hh.dtype), w_hh,
                      preferred_element_type=jnp.float32)
        )  # (B, 4H), f32

        i_g = jax.nn.sigmoid(gates[:, 0 * H:1 * H])
        f_g = jax.nn.sigmoid(gates[:, 1 * H:2 * H])
        g_g = jnp.tanh(gates[:, 2 * H:3 * H])
        o_g = jax.nn.sigmoid(gates[:, 3 * H:4 * H])

        c_new = f_g * c + i_g * g_g
        h_new = o_g * jnp.tanh(c_new)

        c_scr[...] = c_new
        h_scr[...] = h_new
        out_ref[pl.ds(row, B), :] = h_new.astype(out_ref.dtype)
        return carry

    # Short fixed trip count -> fully unrolled for LLO scheduler visibility.
    jax.lax.fori_loop(0, T, step, 0, unroll=True)

    hn_ref[...] = h_scr[...].astype(hn_ref.dtype)
    cn_ref[...] = c_scr[...].astype(cn_ref.dtype)


def memory_forward(x, w_ih, w_hh, b, h0, c0, *, compute_dtype=jnp.bfloat16):
    """Runs the LSTM over the full sequence. Returns (out, h_n, c_n).

    compute_dtype: dtype of the MXU operands (bf16 fast path, f32 exact path).
    Accumulation and gate math are always f32.
    """
    T, B, D = x.shape
    H = h0.shape[-1]

    # Leading-dim merge is free in XLA; keeps the kernel fully 2-D / lane-dense.
    x_flat = x.reshape(T * B, D).astype(compute_dtype)
    w_ih_c = w_ih.astype(compute_dtype)
    w_hh_c = w_hh.astype(compute_dtype)
    b_f32 = b.astype(jnp.float32)

    grid_spec = pltpu.PrefetchScalarGridSpec(
        num_scalar_prefetch=0,
        grid=(1,),  # single invocation; the time loop lives inside the kernel
        in_specs=[
            pl.BlockSpec((T * B, D), lambda i: (0, 0)),      # x (flattened)
            pl.BlockSpec((D, 4 * H), lambda i: (0, 0)),      # w_ih
            pl.BlockSpec((H, 4 * H), lambda i: (0, 0)),      # w_hh
            pl.BlockSpec((1, 4 * H), lambda i: (0, 0)),      # bias
            pl.BlockSpec((B, H), lambda i: (0, 0)),          # h0
            pl.BlockSpec((B, H), lambda i: (0, 0)),          # c0
        ],
        out_specs=[
            pl.BlockSpec((T * B, H), lambda i: (0, 0)),      # out (flattened)
            pl.BlockSpec((B, H), lambda i: (0, 0)),          # h_n
            pl.BlockSpec((B, H), lambda i: (0, 0)),          # c_n
        ],
        scratch_shapes=[
            pltpu.VMEM((B, H), jnp.float32),                 # h state
            pltpu.VMEM((B, H), jnp.float32),                 # c state
            pltpu.VMEM((T * B, 4 * H), jnp.float32),         # hoisted x@W_ih+b
        ],
    )

    out_flat, hn, cn = pl.pallas_call(
        lstm_fused_kernel,
        out_shape=(
            jax.ShapeDtypeStruct((T * B, H), x.dtype),
            jax.ShapeDtypeStruct((B, H), x.dtype),
            jax.ShapeDtypeStruct((B, H), x.dtype),
        ),
        grid_spec=grid_spec,
        compiler_params=pltpu.CompilerParams(
            dimension_semantics=("arbitrary",)),
    )(x_flat, w_ih_c, w_hh_c, b_f32, h0, c0)

    return out_flat.reshape(T, B, H), hn, cn


def lstm_reference(x, w_ih, w_hh, b, h0, c0):
    """Pure-JAX f32 reference with identical PyTorch LSTM semantics."""
    H = h0.shape[-1]

    def step(carry, x_t):
        h, c = carry
        gates = x_t @ w_ih + h @ w_hh + b[0]
        i_g = jax.nn.sigmoid(gates[:, 0 * H:1 * H])
        f_g = jax.nn.sigmoid(gates[:, 1 * H:2 * H])
        g_g = jnp.tanh(gates[:, 2 * H:3 * H])
        o_g = jax.nn.sigmoid(gates[:, 3 * H:4 * H])
        c_new = f_g * c + i_g * g_g
        h_new = o_g * jnp.tanh(c_new)
        return (h_new, c_new), h_new

    (h_n, c_n), outs = jax.lax.scan(step, (h0, c0), x)
    return outs, h_n, c_n


if __name__ == "__main__":
    # Small, lane-aligned shapes consistent with the module:
    # seq=8, batch=8, input_size=128, hidden_size=128 (stand-in for 256).
    T, B, D, H = 8, 8, 128, 128

    key = jax.random.PRNGKey(0)
    kx, kh, kc, k1, k2, k3, k4 = jax.random.split(key, 7)

    # PyTorch LSTM init: uniform(-1/sqrt(H), 1/sqrt(H)); gate order [i,f,g,o].
    bound = 1.0 / jnp.sqrt(jnp.float32(H))
    w_ih_pt = jax.random.uniform(k1, (4 * H, D), jnp.float32, -bound, bound)
    w_hh_pt = jax.random.uniform(k2, (4 * H, H), jnp.float32, -bound, bound)
    b_ih = jax.random.uniform(k3, (4 * H,), jnp.float32, -bound, bound)
    b_hh = jax.random.uniform(k4, (4 * H,), jnp.float32, -bound, bound)

    w_ih = w_ih_pt.T                      # (D, 4H)
    w_hh = w_hh_pt.T                      # (H, 4H)
    b = (b_ih + b_hh).reshape(1, 4 * H)   # (1, 4H)

    x = jax.random.normal(kx, (T, B, D), jnp.float32)
    h0 = jax.random.normal(kh, (B, H), jnp.float32) * 0.1
    c0 = jax.random.normal(kc, (B, H), jnp.float32) * 0.1

    out_ref_, h_ref_, c_ref_ = lstm_reference(x, w_ih, w_hh, b, h0, c0)

    # 1) Exact-semantics check: f32 matmul operands.
    out, h_n, c_n = memory_forward(x, w_ih, w_hh, b, h0, c0,
                                   compute_dtype=jnp.float32)
    jax.block_until_ready((out, h_n, c_n))
    assert jnp.allclose(out, out_ref_, atol=1e-5, rtol=1e-5)
    assert jnp.allclose(h_n, h_ref_, atol=1e-5, rtol=1e-5)
    assert jnp.allclose(c_n, c_ref_, atol=1e-5, rtol=1e-5)

    # 2) Fast path: bf16 matmul operands, f32 accumulation and gate math.
    out_bf, h_bf, c_bf = memory_forward(x, w_ih, w_hh, b, h0, c0,
                                        compute_dtype=jnp.bfloat16)
    jax.block_until_ready((out_bf, h_bf, c_bf))
    assert jnp.allclose(out_bf, out_ref_, atol=5e-2, rtol=5e-2)
    assert jnp.allclose(h_bf, h_ref_, atol=5e-2, rtol=5e-2)
    assert jnp.allclose(c_bf, c_ref_, atol=5e-2, rtol=5e-2)

    print("KERNEL_OK")
</pallas_src>

<mosaic_0001>
module attributes {stable_mosaic.version = 11 : i64} {
  func.func @lstm_fused_kernel(%arg0: i32, %arg1: memref<64x128xf32, #tpu.memory_space<vmem>>, %arg2: memref<128x512xf32, #tpu.memory_space<vmem>>, %arg3: memref<128x512xf32, #tpu.memory_space<vmem>>, %arg4: memref<1x512xf32, #tpu.memory_space<vmem>>, %arg5: memref<8x128xf32, #tpu.memory_space<vmem>>, %arg6: memref<8x128xf32, #tpu.memory_space<vmem>>, %arg7: memref<64x128xf32, #tpu.memory_space<vmem>>, %arg8: memref<8x128xf32, #tpu.memory_space<vmem>>, %arg9: memref<8x128xf32, #tpu.memory_space<vmem>>, %arg10: memref<8x128xf32, #tpu.memory_space<vmem>>, %arg11: memref<8x128xf32, #tpu.memory_space<vmem>>, %arg12: memref<64x512xf32, #tpu.memory_space<vmem>>) attributes {dimension_semantics = [#tpu.dimension_semantics<arbitrary>], iteration_bounds = array<i64: 1>, scalar_prefetch = 0 : i64, scratch_operands = 3 : i64, tpu.core_type = #tpu.core_type<tc>, window_params = [{pipeline_mode = #tpu.pipeline_mode<synchronous>, transform_indices = @transform_0, window_bounds = array<i64: 64, 128>}, {pipeline_mode = #tpu.pipeline_mode<synchronous>, transform_indices = @transform_1, window_bounds = array<i64: 128, 512>}, {pipeline_mode = #tpu.pipeline_mode<synchronous>, transform_indices = @transform_2, window_bounds = array<i64: 128, 512>}, {pipeline_mode = #tpu.pipeline_mode<synchronous>, transform_indices = @transform_3, window_bounds = array<i64: 1, 512>}, {pipeline_mode = #tpu.pipeline_mode<synchronous>, transform_indices = @transform_4, window_bounds = array<i64: 8, 128>}, {pipeline_mode = #tpu.pipeline_mode<synchronous>, transform_indices = @transform_5, window_bounds = array<i64: 8, 128>}, {pipeline_mode = #tpu.pipeline_mode<synchronous>, transform_indices = @transform_6, window_bounds = array<i64: 64, 128>}, {pipeline_mode = #tpu.pipeline_mode<synchronous>, transform_indices = @transform_7, window_bounds = array<i64: 8, 128>}, {pipeline_mode = #tpu.pipeline_mode<synchronous>, transform_indices = @transform_8, window_bounds = array<i64: 8, 128>}]} {
    %c0 = arith.constant 0 : index
    %c0_0 = arith.constant 0 : index
    %0 = vector.load %arg1[%c0, %c0_0] : memref<64x128xf32, #tpu.memory_space<vmem>>, vector<64x128xf32>
    %c0_1 = arith.constant 0 : index
    %c0_2 = arith.constant 0 : index
    %1 = vector.load %arg2[%c0_1, %c0_2] : memref<128x512xf32, #tpu.memory_space<vmem>>, vector<128x512xf32>
    %cst = arith.constant dense<0.000000e+00> : vector<64x512xf32>
    %2 = tpu.matmul %0, %1, %cst {dimension_numbers = #tpu.dot_dimension_numbers<[1], [0], [0], [1], [0, 0, 1, 1], [], []>} : vector<64x128xf32>, vector<128x512xf32>, vector<64x512xf32> -> vector<64x512xf32>
    %c0_3 = arith.constant 0 : index
    %c0_4 = arith.constant 0 : index
    %3 = vector.load %arg4[%c0_3, %c0_4] : memref<1x512xf32, #tpu.memory_space<vmem>>, vector<1x512xf32>
    %4 = vector.broadcast %3 : vector<1x512xf32> to vector<64x512xf32>
    %5 = arith.addf %2, %4 : vector<64x512xf32>
    %c0_5 = arith.constant 0 : index
    %c0_6 = arith.constant 0 : index
    %6 = vector.load %arg12[%c0_5, %c0_6] : memref<64x512xf32, #tpu.memory_space<vmem>>, vector<64x512xf32>
    tpu.vector_store %arg12[%c0_5, %c0_6], %5 {strides = array<i32>} : memref<64x512xf32, #tpu.memory_space<vmem>>, vector<64x512xf32>,
    %c0_7 = arith.constant 0 : index
    %c0_8 = arith.constant 0 : index
    %7 = vector.load %arg5[%c0_7, %c0_8] : memref<8x128xf32, #tpu.memory_space<vmem>>, vector<8x128xf32>
    %c0_9 = arith.constant 0 : index
    %c0_10 = arith.constant 0 : index
    %8 = vector.load %arg10[%c0_9, %c0_10] : memref<8x128xf32, #tpu.memory_space<vmem>>, vector<8x128xf32>
    tpu.vector_store %arg10[%c0_9, %c0_10], %7 {strides = array<i32>} : memref<8x128xf32, #tpu.memory_space<vmem>>, vector<8x128xf32>,
    %c0_11 = arith.constant 0 : index
    %c0_12 = arith.constant 0 : index
    %9 = vector.load %arg6[%c0_11, %c0_12] : memref<8x128xf32, #tpu.memory_space<vmem>>, vector<8x128xf32>
    %c0_13 = arith.constant 0 : index
    %c0_14 = arith.constant 0 : index
    %10 = vector.load %arg11[%c0_13, %c0_14] : memref<8x128xf32, #tpu.memory_space<vmem>>, vector<8x128xf32>
    tpu.vector_store %arg11[%c0_13, %c0_14], %9 {strides = array<i32>} : memref<8x128xf32, #tpu.memory_space<vmem>>, vector<8x128xf32>,
    %c0_15 = arith.constant 0 : index
    %c0_16 = arith.constant 0 : index
    %11 = vector.load %arg3[%c0_15, %c0_16] : memref<128x512xf32, #tpu.memory_space<vmem>>, vector<128x512xf32>
    %c0_i32 = arith.constant 0 : i32
    %c0_17 = arith.constant 0 : index
    %c0_18 = arith.constant 0 : index
    %12 = vector.load %arg10[%c0_17, %c0_18] : memref<8x128xf32, #tpu.memory_space<vmem>>, vector<8x128xf32>
    %c0_19 = arith.constant 0 : index
    %c0_20 = arith.constant 0 : index
    %13 = vector.load %arg11[%c0_19, %c0_20] : memref<8x128xf32, #tpu.memory_space<vmem>>, vector<8x128xf32>
    %c8_i32 = arith.constant 8 : i32
    %14 = arith.muli %c0_i32, %c8_i32 : i32
    %15 = tpu.assume_multiple %14, 8 : i32
    %16 = arith.index_cast %15 : i32 to index
    %c0_21 = arith.constant 0 : index
    %17 = vector.load %arg12[%16, %c0_21] : memref<64x512xf32, #tpu.memory_space<vmem>>, vector<8x512xf32>
    %cst_22 = arith.constant dense<0.000000e+00> : vector<8x512xf32>
    %18 = tpu.matmul %12, %11, %cst_22 {dimension_numbers = #tpu.dot_dimension_numbers<[1], [0], [0], [1], [0, 0, 1, 1], [], []>} : vector<8x128xf32>, vector<128x512xf32>, vector<8x512xf32> -> vector<8x512xf32>
    %19 = arith.addf %17, %18 : vector<8x512xf32>
    %20 = vector.extract_strided_slice %19 {offsets = [0, 0], sizes = [8, 128], strides = [1, 1]} : vector<8x512xf32> to vector<8x128xf32>
    %21 = arith.negf %20 : vector<8x128xf32>
    %22 = math.exp %21 : vector<8x128xf32>
    %cst_23 = arith.constant 1.000000e+00 : f32
    %23 = vector.broadcast %cst_23 : f32 to vector<8x128xf32>
    %24 = arith.addf %23, %22 : vector<8x128xf32>
    %25 = arith.divf %23, %24 : vector<8x128xf32>
    %26 = vector.extract_strided_slice %19 {offsets = [0, 128], sizes = [8, 128], strides = [1, 1]} : vector<8x512xf32> to vector<8x128xf32>
    %27 = arith.negf %26 : vector<8x128xf32>
    %28 = math.exp %27 : vector<8x128xf32>
    %cst_24 = arith.constant 1.000000e+00 : f32
    %29 = vector.broadcast %cst_24 : f32 to vector<8x128xf32>
    %30 = arith.addf %29, %28 : vector<8x128xf32>
    %31 = arith.divf %29, %30 : vector<8x128xf32>
    %32 = vector.extract_strided_slice %19 {offsets = [0, 256], sizes = [8, 128], strides = [1, 1]} : vector<8x512xf32> to vector<8x128xf32>
    %33 = math.tanh %32 : vector<8x128xf32>
    %34 = vector.extract_strided_slice %19 {offsets = [0, 384], sizes = [8, 128], strides = [1, 1]} : vector<8x512xf32> to vector<8x128xf32>
    %35 = arith.negf %34 : vector<8x128xf32>
    %36 = math.exp %35 : vector<8x128xf32>
    %cst_25 = arith.constant 1.000000e+00 : f32
    %37 = vector.broadcast %cst_25 : f32 to vector<8x128xf32>
    %38 = arith.addf %37, %36 : vector<8x128xf32>
    %39 = arith.divf %37, %38 : vector<8x128xf32>
    %40 = arith.mulf %31, %13 : vector<8x128xf32>
    %41 = arith.mulf %25, %33 : vector<8x128xf32>
    %42 = arith.addf %40, %41 : vector<8x128xf32>
    %43 = math.tanh %42 : vector<8x128xf32>
    %44 = arith.mulf %39, %43 : vector<8x128xf32>
    %c0_26 = arith.constant 0 : index
    %c0_27 = arith.constant 0 : index
    %45 = vector.load %arg11[%c0_26, %c0_27] : memref<8x128xf32, #tpu.memory_space<vmem>>, vector<8x128xf32>
    tpu.vector_store %arg11[%c0_26, %c0_27], %42 {strides = array<i32>} : memref<8x128xf32, #tpu.memory_space<vmem>>, vector<8x128xf32>,
    %c0_28 = arith.constant 0 : index
    %c0_29 = arith.constant 0 : index
    %46 = vector.load %arg10[%c0_28, %c0_29] : memref<8x128xf32, #tpu.memory_space<vmem>>, vector<8x128xf32>
    tpu.vector_store %arg10[%c0_28, %c0_29], %44 {strides = array<i32>} : memref<8x128xf32, #tpu.memory_space<vmem>>, vector<8x128xf32>,
    %47 = arith.index_cast %15 : i32 to index
    %c0_30 = arith.constant 0 : index
    %48 = vector.load %arg7[%47, %c0_30] : memref<64x128xf32, #tpu.memory_space<vmem>>, vector<8x128xf32>
    tpu.vector_store %arg7[%47, %c0_30], %44 {strides = array<i32>} : memref<64x128xf32, #tpu.memory_space<vmem>>, vector<8x128xf32>,
    %c1_i32 = arith.constant 1 : i32
    %c0_31 = arith.constant 0 : index
    %c0_32 = arith.constant 0 : index
    %49 = vector.load %arg10[%c0_31, %c0_32] : memref<8x128xf32, #tpu.memory_space<vmem>>, vector<8x128xf32>
    %c0_33 = arith.constant 0 : index
    %c0_34 = arith.constant 0 : index
    %50 = vector.load %arg11[%c0_33, %c0_34] : memref<8x128xf32, #tpu.memory_space<vmem>>, vector<8x128xf32>
    %c8_i32_35 = arith.constant 8 : i32
    %51 = arith.muli %c1_i32, %c8_i32_35 : i32
    %52 = tpu.assume_multiple %51, 8 : i32
    %53 = arith.index_cast %52 : i32 to index
    %c0_36 = arith.constant 0 : index
    %54 = vector.load %arg12[%53, %c0_36] : memref<64x512xf32, #tpu.memory_space<vmem>>, vector<8x512xf32>
    %cst_37 = arith.constant dense<0.000000e+00> : vector<8x512xf32>
    %55 = tpu.matmul %49, %11, %cst_37 {dimension_numbers = #tpu.dot_dimension_numbers<[1], [0], [0], [1], [0, 0, 1, 1], [], []>} : vector<8x128xf32>, vector<128x512xf32>, vector<8x512xf32> -> vector<8x512xf32>
    %56 = arith.addf %54, %55 : vector<8x512xf32>
    %57 = vector.extract_strided_slice %56 {offsets = [0, 0], sizes = [8, 128], strides = [1, 1]} : vector<8x512xf32> to vector<8x128xf32>
    %58 = arith.negf %57 : vector<8x128xf32>
    %59 = math.exp %58 : vector<8x128xf32>
    %cst_38 = arith.constant 1.000000e+00 : f32
    %60 = vector.broadcast %cst_38 : f32 to vector<8x128xf32>
    %61 = arith.addf %60, %59 : vector<8x128xf32>
    %62 = arith.divf %60, %61 : vector<8x128xf32>
    %63 = vector.extract_strided_slice %56 {offsets = [0, 128], sizes = [8, 128], strides = [1, 1]} : vector<8x512xf32> to vector<8x128xf32>
    %64 = arith.negf %63 : vector<8x128xf32>
    %65 = math.exp %64 : vector<8x128xf32>
    %cst_39 = arith.constant 1.000000e+00 : f32
    %66 = vector.broadcast %cst_39 : f32 to vector<8x128xf32>
    %67 = arith.addf %66, %65 : vector<8x128xf32>
    %68 = arith.divf %66, %67 : vector<8x128xf32>
    %69 = vector.extract_strided_slice %56 {offsets = [0, 256], sizes = [8, 128], strides = [1, 1]} : vector<8x512xf32> to vector<8x128xf32>
    %70 = math.tanh %69 : vector<8x128xf32>
    %71 = vector.extract_strided_slice %56 {offsets = [0, 384], sizes = [8, 128], strides = [1, 1]} : vector<8x512xf32> to vector<8x128xf32>
    %72 = arith.negf %71 : vector<8x128xf32>
    %73 = math.exp %72 : vector<8x128xf32>
    %cst_40 = arith.constant 1.000000e+00 : f32
    %74 = vector.broadcast %cst_40 : f32 to vector<8x128xf32>
    %75 = arith.addf %74, %73 : vector<8x128xf32>
    %76 = arith.divf %74, %75 : vector<8x128xf32>
    %77 = arith.mulf %68, %50 : vector<8x128xf32>
    %78 = arith.mulf %62, %70 : vector<8x128xf32>
    %79 = arith.addf %77, %78 : vector<8x128xf32>
    %80 = math.tanh %79 : vector<8x128xf32>
    %81 = arith.mulf %76, %80 : vector<8x128xf32>
    %c0_41 = arith.constant 0 : index
    %c0_42 = arith.constant 0 : index
    %82 = vector.load %arg11[%c0_41, %c0_42] : memref<8x128xf32, #tpu.memory_space<vmem>>, vector<8x128xf32>
    tpu.vector_store %arg11[%c0_41, %c0_42], %79 {strides = array<i32>} : memref<8x128xf32, #tpu.memory_space<vmem>>, vector<8x128xf32>,
    %c0_43 = arith.constant 0 : index
    %c0_44 = arith.constant 0 : index
    %83 = vector.load %arg10[%c0_43, %c0_44] : memref<8x128xf32, #tpu.memory_space<vmem>>, vector<8x128xf32>
    tpu.vector_store %arg10[%c0_43, %c0_44], %81 {strides = array<i32>} : memref<8x128xf32, #tpu.memory_space<vmem>>, vector<8x128xf32>,
    %84 = arith.index_cast %52 : i32 to index
    %c0_45 = arith.constant 0 : index
    %85 = vector.load %arg7[%84, %c0_45] : memref<64x128xf32, #tpu.memory_space<vmem>>, vector<8x128xf32>
    tpu.vector_store %arg7[%84, %c0_45], %81 {strides = array<i32>} : memref<64x128xf32, #tpu.memory_space<vmem>>, vector<8x128xf32>,
    %c2_i32 = arith.constant 2 : i32
    %c0_46 = arith.constant 0 : index
    %c0_47 = arith.constant 0 : index
    %86 = vector.load %arg10[%c0_46, %c0_47] : memref<8x128xf32, #tpu.memory_space<vmem>>, vector<8x128xf32>
    %c0_48 = arith.constant 0 : index
    %c0_49 = arith.constant 0 : index
    %87 = vector.load %arg11[%c0_48, %c0_49] : memref<8x128xf32, #tpu.memory_space<vmem>>, vector<8x128xf32>
    %c8_i32_50 = arith.constant 8 : i32
    %88 = arith.muli %c2_i32, %c8_i32_50 : i32
    %89 = tpu.assume_multiple %88, 8 : i32
    %90 = arith.index_cast %89 : i32 to index
    %c0_51 = arith.constant 0 : index
    %91 = vector.load %arg12[%90, %c0_51] : memref<64x512xf32, #tpu.memory_space<vmem>>, vector<8x512xf32>
    %cst_52 = arith.constant dense<0.000000e+00> : vector<8x512xf32>
    %92 = tpu.matmul %86, %11, %cst_52 {dimension_numbers = #tpu.dot_dimension_numbers<[1], [0], [0], [1], [0, 0, 1, 1], [], []>} : vector<8x128xf32>, vector<128x512xf32>, vector<8x512xf32> -> vector<8x512xf32>
    %93 = arith.addf %91, %92 : vector<8x512xf32>
    %94 = vector.extract_strided_slice %93 {offsets = [0, 0], sizes = [8, 128], strides = [1, 1]} : vector<8x512xf32> to vector<8x128xf32>
    %95 = arith.negf %94 : vector<8x128xf32>
    %96 = math.exp %95 : vector<8x128xf32>
    %cst_53 = arith.constant 1.000000e+00 : f32
    %97 = vector.broadcast %cst_53 : f32 to vector<8x128xf32>
    %98 = arith.addf %97, %96 : vector<8x128xf32>
    %99 = arith.divf %97, %98 : vector<8x128xf32>
    %100 = vector.extract_strided_slice %93 {offsets = [0, 128], sizes = [8, 128], strides = [1, 1]} : vector<8x512xf32> to vector<8x128xf32>
    %101 = arith.negf %100 : vector<8x128xf32>
    %102 = math.exp %101 : vector<8x128xf32>
    %cst_54 = arith.constant 1.000000e+00 : f32
    %103 = vector.broadcast %cst_54 : f32 to vector<8x128xf32>
    %104 = arith.addf %103, %102 : vector<8x128xf32>
    %105 = arith.divf %103, %104 : vector<8x128xf32>
    %106 = vector.extract_strided_slice %93 {offsets = [0, 256], sizes = [8, 128], strides = [1, 1]} : vector<8x512xf32> to vector<8x128xf32>
    %107 = math.tanh %106 : vector<8x128xf32>
    %108 = vector.extract_strided_slice %93 {offsets = [0, 384], sizes = [8, 128], strides = [1, 1]} : vector<8x512xf32> to vector<8x128xf32>
    %109 = arith.negf %108 : vector<8x128xf32>
    %110 = math.exp %109 : vector<8x128xf32>
    %cst_55 = arith.constant 1.000000e+00 : f32
    %111 = vector.broadcast %cst_55 : f32 to vector<8x128xf32>
    %112 = arith.addf %111, %110 : vector<8x128xf32>
    %113 = arith.divf %111, %112 : vector<8x128xf32>
    %114 = arith.mulf %105, %87 : vector<8x128xf32>
    %115 = arith.mulf %99, %107 : vector<8x128xf32>
    %116 = arith.addf %114, %115 : vector<8x128xf32>
    %117 = math.tanh %116 : vector<8x128xf32>
    %118 = arith.mulf %113, %117 : vector<8x128xf32>
    %c0_56 = arith.constant 0 : index
    %c0_57 = arith.constant 0 : index
    %119 = vector.load %arg11[%c0_56, %c0_57] : memref<8x128xf32, #tpu.memory_space<vmem>>, vector<8x128xf32>
    tpu.vector_store %arg11[%c0_56, %c0_57], %116 {strides = array<i32>} : memref<8x128xf32, #tpu.memory_space<vmem>>, vector<8x128xf32>,
    %c0_58 = arith.constant 0 : index
    %c0_59 = arith.constant 0 : index
    %120 = vector.load %arg10[%c0_58, %c0_59] : memref<8x128xf32, #tpu.memory_space<vmem>>, vector<8x128xf32>
    tpu.vector_store %arg10[%c0_58, %c0_59], %118 {strides = array<i32>} : memref<8x128xf32, #tpu.memory_space<vmem>>, vector<8x128xf32>,
    %121 = arith.index_cast %89 : i32 to index
    %c0_60 = arith.constant 0 : index
    %122 = vector.load %arg7[%121, %c0_60] : memref<64x128xf32, #tpu.memory_space<vmem>>, vector<8x128xf32>
    tpu.vector_store %arg7[%121, %c0_60], %118 {strides = array<i32>} : memref<64x128xf32, #tpu.memory_space<vmem>>, vector<8x128xf32>,
    %c3_i32 = arith.constant 3 : i32
    %c0_61 = arith.constant 0 : index
    %c0_62 = arith.constant 0 : index
    %123 = vector.load %arg10[%c0_61, %c0_62] : memref<8x128xf32, #tpu.memory_space<vmem>>, vector<8x128xf32>
    %c0_63 = arith.constant 0 : index
    %c0_64 = arith.constant 0 : index
    %124 = vector.load %arg11[%c0_63, %c0_64] : memref<8x128xf32, #tpu.memory_space<vmem>>, vector<8x128xf32>
    %c8_i32_65 = arith.constant 8 : i32
    %125 = arith.muli %c3_i32, %c8_i32_65 : i32
    %126 = tpu.assume_multiple %125, 8 : i32
    %127 = arith.index_cast %126 : i32 to index
    %c0_66 = arith.constant 0 : index
    %128 = vector.load %arg12[%127, %c0_66] : memref<64x512xf32, #tpu.memory_space<vmem>>, vector<8x512xf32>
    %cst_67 = arith.constant dense<0.000000e+00> : vector<8x512xf32>
    %129 = tpu.matmul %123, %11, %cst_67 {dimension_numbers = #tpu.dot_dimension_numbers<[1], [0], [0], [1], [0, 0, 1, 1], [], []>} : vector<8x128xf32>, vector<128x512xf32>, vector<8x512xf32> -> vector<8x512xf32>
    %130 = arith.addf %128, %129 : vector<8x512xf32>
    %131 = vector.extract_strided_slice %130 {offsets = [0, 0], sizes = [8, 128], strides = [1, 1]} : vector<8x512xf32> to vector<8x128xf32>
    %132 = arith.negf %131 : vector<8x128xf32>
    %133 = math.exp %132 : vector<8x128xf32>
    %cst_68 = arith.constant 1.000000e+00 : f32
    %134 = vector.broadcast %cst_68 : f32 to vector<8x128xf32>
    %135 = arith.addf %134, %133 : vector<8x128xf32>
    %136 = arith.divf %134, %135 : vector<8x128xf32>
    %137 = vector.extract_strided_slice %130 {offsets = [0, 128], sizes = [8, 128], strides = [1, 1]} : vector<8x512xf32> to vector<8x128xf32>
    %138 = arith.negf %137 : vector<8x128xf32>
    %139 = math.exp %138 : vector<8x128xf32>
    %cst_69 = arith.constant 1.000000e+00 : f32
    %140 = vector.broadcast %cst_69 : f32 to vector<8x128xf32>
    %141 = arith.addf %140, %139 : vector<8x128xf32>
    %142 = arith.divf %140, %141 : vector<8x128xf32>
    %143 = vector.extract_strided_slice %130 {offsets = [0, 256], sizes = [8, 128], strides = [1, 1]} : vector<8x512xf32> to vector<8x128xf32>
    %144 = math.tanh %143 : vector<8x128xf32>
    %145 = vector.extract_strided_slice %130 {offsets = [0, 384], sizes = [8, 128], strides = [1, 1]} : vector<8x512xf32> to vector<8x128xf32>
    %146 = arith.negf %145 : vector<8x128xf32>
    %147 = math.exp %146 : vector<8x128xf32>
    %cst_70 = arith.constant 1.000000e+00 : f32
    %148 = vector.broadcast %cst_70 : f32 to vector<8x128xf32>
    %149 = arith.addf %148, %147 : vector<8x128xf32>
    %150 = arith.divf %148, %149 : vector<8x128xf32>
    %151 = arith.mulf %142, %124 : vector<8x128xf32>
    %152 = arith.mulf %136, %144 : vector<8x128xf32>
    %153 = arith.addf %151, %152 : vector<8x128xf32>
    %154 = math.tanh %153 : vector<8x128xf32>
    %155 = arith.mulf %150, %154 : vector<8x128xf32>
    %c0_71 = arith.constant 0 : index
    %c0_72 = arith.constant 0 : index
    %156 = vector.load %arg11[%c0_71, %c0_72] : memref<8x128xf32, #tpu.memory_space<vmem>>, vector<8x128xf32>
    tpu.vector_store %arg11[%c0_71, %c0_72], %153 {strides = array<i32>} : memref<8x128xf32, #tpu.memory_space<vmem>>, vector<8x128xf32>,
    %c0_73 = arith.constant 0 : index
    %c0_74 = arith.constant 0 : index
    %157 = vector.load %arg10[%c0_73, %c0_74] : memref<8x128xf32, #tpu.memory_space<vmem>>, vector<8x128xf32>
    tpu.vector_store %arg10[%c0_73, %c0_74], %155 {strides = array<i32>} : memref<8x128xf32, #tpu.memory_space<vmem>>, vector<8x128xf32>,
    %158 = arith.index_cast %126 : i32 to index
    %c0_75 = arith.constant 0 : index
    %159 = vector.load %arg7[%158, %c0_75] : memref<64x128xf32, #tpu.memory_space<vmem>>, vector<8x128xf32>
    tpu.vector_store %arg7[%158, %c0_75], %155 {strides = array<i32>} : memref<64x128xf32, #tpu.memory_space<vmem>>, vector<8x128xf32>,
    %c4_i32 = arith.constant 4 : i32
    %c0_76 = arith.constant 0 : index
    %c0_77 = arith.constant 0 : index
    %160 = vector.load %arg10[%c0_76, %c0_77] : memref<8x128xf32, #tpu.memory_space<vmem>>, vector<8x128xf32>
    %c0_78 = arith.constant 0 : index
    %c0_79 = arith.constant 0 : index
    %161 = vector.load %arg11[%c0_78, %c0_79] : memref<8x128xf32, #tpu.memory_space<vmem>>, vector<8x128xf32>
    %c8_i32_80 = arith.constant 8 : i32
    %162 = arith.muli %c4_i32, %c8_i32_80 : i32
    %163 = tpu.assume_multiple %162, 8 : i32
    %164 = arith.index_cast %163 : i32 to index
    %c0_81 = arith.constant 0 : index
    %165 = vector.load %arg12[%164, %c0_81] : memref<64x512xf32, #tpu.memory_space<vmem>>, vector<8x512xf32>
    %cst_82 = arith.constant dense<0.000000e+00> : vector<8x512xf32>
    %166 = tpu.matmul %160, %11, %cst_82 {dimension_numbers = #tpu.dot_dimension_numbers<[1], [0], [0], [1], [0, 0, 1, 1], [], []>} : vector<8x128xf32>, vector<128x512xf32>, vector<8x512xf32> -> vector<8x512xf32>
    %167 = arith.addf %165, %166 : vector<8x512xf32>
    %168 = vector.extract_strided_slice %167 {offsets = [0, 0], sizes = [8, 128], strides = [1, 1]} : vector<8x512xf32> to vector<8x128xf32>
    %169 = arith.negf %168 : vector<8x128xf32>
    %170 = math.exp %169 : vector<8x128xf32>
    %cst_83 = arith.constant 1.000000e+00 : f32
    %171 = vector.broadcast %cst_83 : f32 to vector<8x128xf32>
    %172 = arith.addf %171, %170 : vector<8x128xf32>
    %173 = arith.divf %171, %172 : vector<8x128xf32>
    %174 = vector.extract_strided_slice %167 {offsets = [0, 128], sizes = [8, 128], strides = [1, 1]} : vector<8x512xf32> to vector<8x128xf32>
    %175 = arith.negf %174 : vector<8x128xf32>
    %176 = math.exp %175 : vector<8x128xf32>
    %cst_84 = arith.constant 1.000000e+00 : f32
    %177 = vector.broadcast %cst_84 : f32 to vector<8x128xf32>
    %178 = arith.addf %177, %176 : vector<8x128xf32>
    %179 = arith.divf %177, %178 : vector<8x128xf32>
    %180 = vector.extract_strided_slice %167 {offsets = [0, 256], sizes = [8, 128], strides = [1, 1]} : vector<8x512xf32> to vector<8x128xf32>
    %181 = math.tanh %180 : vector<8x128xf32>
    %182 = vector.extract_strided_slice %167 {offsets = [0, 384], sizes = [8, 128], strides = [1, 1]} : vector<8x512xf32> to vector<8x128xf32>
    %183 = arith.negf %182 : vector<8x128xf32>
    %184 = math.exp %183 : vector<8x128xf32>
    %cst_85 = arith.constant 1.000000e+00 : f32
    %185 = vector.broadcast %cst_85 : f32 to vector<8x128xf32>
    %186 = arith.addf %185, %184 : vector<8x128xf32>
    %187 = arith.divf %185, %186 : vector<8x128xf32>
    %188 = arith.mulf %179, %161 : vector<8x128xf32>
    %189 = arith.mulf %173, %181 : vector<8x128xf32>
    %190 = arith.addf %188, %189 : vector<8x128xf32>
    %191 = math.tanh %190 : vector<8x128xf32>
    %192 = arith.mulf %187, %191 : vector<8x128xf32>
    %c0_86 = arith.constant 0 : index
    %c0_87 = arith.constant 0 : index
    %193 = vector.load %arg11[%c0_86, %c0_87] : memref<8x128xf32, #tpu.memory_space<vmem>>, vector<8x128xf32>
    tpu.vector_store %arg11[%c0_86, %c0_87], %190 {strides = array<i32>} : memref<8x128xf32, #tpu.memory_space<vmem>>, vector<8x128xf32>,
    %c0_88 = arith.constant 0 : index
    %c0_89 = arith.constant 0 : index
    %194 = vector.load %arg10[%c0_88, %c0_89] : memref<8x128xf32, #tpu.memory_space<vmem>>, vector<8x128xf32>
    tpu.vector_store %arg10[%c0_88, %c0_89], %192 {strides = array<i32>} : memref<8x128xf32, #tpu.memory_space<vmem>>, vector<8x128xf32>,
    %195 = arith.index_cast %163 : i32 to index
    %c0_90 = arith.constant 0 : index
    %196 = vector.load %arg7[%195, %c0_90] : memref<64x128xf32, #tpu.memory_space<vmem>>, vector<8x128xf32>
    tpu.vector_store %arg7[%195, %c0_90], %192 {strides = array<i32>} : memref<64x128xf32, #tpu.memory_space<vmem>>, vector<8x128xf32>,
    %c5_i32 = arith.constant 5 : i32
    %c0_91 = arith.constant 0 : index
    %c0_92 = arith.constant 0 : index
    %197 = vector.load %arg10[%c0_91, %c0_92] : memref<8x128xf32, #tpu.memory_space<vmem>>, vector<8x128xf32>
    %c0_93 = arith.constant 0 : index
    %c0_94 = arith.constant 0 : index
    %198 = vector.load %arg11[%c0_93, %c0_94] : memref<8x128xf32, #tpu.memory_space<vmem>>, vector<8x128xf32>
    %c8_i32_95 = arith.constant 8 : i32
    %199 = arith.muli %c5_i32, %c8_i32_95 : i32
    %200 = tpu.assume_multiple %199, 8 : i32
    %201 = arith.index_cast %200 : i32 to index
    %c0_96 = arith.constant 0 : index
    %202 = vector.load %arg12[%201, %c0_96] : memref<64x512xf32, #tpu.memory_space<vmem>>, vector<8x512xf32>
    %cst_97 = arith.constant dense<0.000000e+00> : vector<8x512xf32>
    %203 = tpu.matmul %197, %11, %cst_97 {dimension_numbers = #tpu.dot_dimension_numbers<[1], [0], [0], [1], [0, 0, 1, 1], [], []>} : vector<8x128xf32>, vector<128x512xf32>, vector<8x512xf32> -> vector<8x512xf32>
    %204 = arith.addf %202, %203 : vector<8x512xf32>
    %205 = vector.extract_strided_slice %204 {offsets = [0, 0], sizes = [8, 128], strides = [1, 1]} : vector<8x512xf32> to vector<8x128xf32>
    %206 = arith.negf %205 : vector<8x128xf32>
    %207 = math.exp %206 : vector<8x128xf32>
    %cst_98 = arith.constant 1.000000e+00 : f32
    %208 = vector.broadcast %cst_98 : f32 to vector<8x128xf32>
    %209 = arith.addf %208, %207 : vector<8x128xf32>
    %210 = arith.divf %208, %209 : vector<8x128xf32>
    %211 = vector.extract_strided_slice %204 {offsets = [0, 128], sizes = [8, 128], strides = [1, 1]} : vector<8x512xf32> to vector<8x128xf32>
    %212 = arith.negf %211 : vector<8x128xf32>
    %213 = math.exp %212 : vector<8x128xf32>
    %cst_99 = arith.constant 1.000000e+00 : f32
    %214 = vector.broadcast %cst_99 : f32 to vector<8x128xf32>
    %215 = arith.addf %214, %213 : vector<8x128xf32>
    %216 = arith.divf %214, %215 : vector<8x128xf32>
    %217 = vector.extract_strided_slice %204 {offsets = [0, 256], sizes = [8, 128], strides = [1, 1]} : vector<8x512xf32> to vector<8x128xf32>
    %218 = math.tanh %217 : vector<8x128xf32>
    %219 = vector.extract_strided_slice %204 {offsets = [0, 384], sizes = [8, 128], strides = [1, 1]} : vector<8x512xf32> to vector<8x128xf32>
    %220 = arith.negf %219 : vector<8x128xf32>
    %221 = math.exp %220 : vector<8x128xf32>
    %cst_100 = arith.constant 1.000000e+00 : f32
    %222 = vector.broadcast %cst_100 : f32 to vector<8x128xf32>
    %223 = arith.addf %222, %221 : vector<8x128xf32>
    %224 = arith.divf %222, %223 : vector<8x128xf32>
    %225 = arith.mulf %216, %198 : vector<8x128xf32>
    %226 = arith.mulf %210, %218 : vector<8x128xf32>
    %227 = arith.addf %225, %226 : vector<8x128xf32>
    %228 = math.tanh %227 : vector<8x128xf32>
    %229 = arith.mulf %224, %228 : vector<8x128xf32>
    %c0_101 = arith.constant 0 : index
    %c0_102 = arith.constant 0 : index
    %230 = vector.load %arg11[%c0_101, %c0_102] : memref<8x128xf32, #tpu.memory_space<vmem>>, vector<8x128xf32>
    tpu.vector_store %arg11[%c0_101, %c0_102], %227 {strides = array<i32>} : memref<8x128xf32, #tpu.memory_space<vmem>>, vector<8x128xf32>,
    %c0_103 = arith.constant 0 : index
    %c0_104 = arith.constant 0 : index
    %231 = vector.load %arg10[%c0_103, %c0_104] : memref<8x128xf32, #tpu.memory_space<vmem>>, vector<8x128xf32>
    tpu.vector_store %arg10[%c0_103, %c0_104], %229 {strides = array<i32>} : memref<8x128xf32, #tpu.memory_space<vmem>>, vector<8x128xf32>,
    %232 = arith.index_cast %200 : i32 to index
    %c0_105 = arith.constant 0 : index
    %233 = vector.load %arg7[%232, %c0_105] : memref<64x128xf32, #tpu.memory_space<vmem>>, vector<8x128xf32>
    tpu.vector_store %arg7[%232, %c0_105], %229 {strides = array<i32>} : memref<64x128xf32, #tpu.memory_space<vmem>>, vector<8x128xf32>,
    %c6_i32 = arith.constant 6 : i32
    %c0_106 = arith.constant 0 : index
    %c0_107 = arith.constant 0 : index
    %234 = vector.load %arg10[%c0_106, %c0_107] : memref<8x128xf32, #tpu.memory_space<vmem>>, vector<8x128xf32>
    %c0_108 = arith.constant 0 : index
    %c0_109 = arith.constant 0 : index
    %235 = vector.load %arg11[%c0_108, %c0_109] : memref<8x128xf32, #tpu.memory_space<vmem>>, vector<8x128xf32>
    %c8_i32_110 = arith.constant 8 : i32
    %236 = arith.muli %c6_i32, %c8_i32_110 : i32
    %237 = tpu.assume_multiple %236, 8 : i32
    %238 = arith.index_cast %237 : i32 to index
    %c0_111 = arith.constant 0 : index
    %239 = vector.load %arg12[%238, %c0_111] : memref<64x512xf32, #tpu.memory_space<vmem>>, vector<8x512xf32>
    %cst_112 = arith.constant dense<0.000000e+00> : vector<8x512xf32>
    %240 = tpu.matmul %234, %11, %cst_112 {dimension_numbers = #tpu.dot_dimension_numbers<[1], [0], [0], [1], [0, 0, 1, 1], [], []>} : vector<8x128xf32>, vector<128x512xf32>, vector<8x512xf32> -> vector<8x512xf32>
    %241 = arith.addf %239, %240 : vector<8x512xf32>
    %242 = vector.extract_strided_slice %241 {offsets = [0, 0], sizes = [8, 128], strides = [1, 1]} : vector<8x512xf32> to vector<8x128xf32>
    %243 = arith.negf %242 : vector<8x128xf32>
    %244 = math.exp %243 : vector<8x128xf32>
    %cst_113 = arith.constant 1.000000e+00 : f32
    %245 = vector.broadcast %cst_113 : f32 to vector<8x128xf32>
    %246 = arith.addf %245, %244 : vector<8x128xf32>
    %247 = arith.divf %245, %246 : vector<8x128xf32>
    %248 = vector.extract_strided_slice %241 {offsets = [0, 128], sizes = [8, 128], strides = [1, 1]} : vector<8x512xf32> to vector<8x128xf32>
    %249 = arith.negf %248 : vector<8x128xf32>
    %250 = math.exp %249 : vector<8x128xf32>
    %cst_114 = arith.constant 1.000000e+00 : f32
    %251 = vector.broadcast %cst_114 : f32 to vector<8x128xf32>
    %252 = arith.addf %251, %250 : vector<8x128xf32>
    %253 = arith.divf %251, %252 : vector<8x128xf32>
    %254 = vector.extract_strided_slice %241 {offsets = [0, 256], sizes = [8, 128], strides = [1, 1]} : vector<8x512xf32> to vector<8x128xf32>
    %255 = math.tanh %254 : vector<8x128xf32>
    %256 = vector.extract_strided_slice %241 {offsets = [0, 384], sizes = [8, 128], strides = [1, 1]} : vector<8x512xf32> to vector<8x128xf32>
    %257 = arith.negf %256 : vector<8x128xf32>
    %258 = math.exp %257 : vector<8x128xf32>
    %cst_115 = arith.constant 1.000000e+00 : f32
    %259 = vector.broadcast %cst_115 : f32 to vector<8x128xf32>
    %260 = arith.addf %259, %258 : vector<8x128xf32>
    %261 = arith.divf %259, %260 : vector<8x128xf32>
    %262 = arith.mulf %253, %235 : vector<8x128xf32>
    %263 = arith.mulf %247, %255 : vector<8x128xf32>
    %264 = arith.addf %262, %263 : vector<8x128xf32>
    %265 = math.tanh %264 : vector<8x128xf32>
    %266 = arith.mulf %261, %265 : vector<8x128xf32>
    %c0_116 = arith.constant 0 : index
    %c0_117 = arith.constant 0 : index
    %267 = vector.load %arg11[%c0_116, %c0_117] : memref<8x128xf32, #tpu.memory_space<vmem>>, vector<8x128xf32>
    tpu.vector_store %arg11[%c0_116, %c0_117], %264 {strides = array<i32>} : memref<8x128xf32, #tpu.memory_space<vmem>>, vector<8x128xf32>,
    %c0_118 = arith.constant 0 : index
    %c0_119 = arith.constant 0 : index
    %268 = vector.load %arg10[%c0_118, %c0_119] : memref<8x128xf32, #tpu.memory_space<vmem>>, vector<8x128xf32>
    tpu.vector_store %arg10[%c0_118, %c0_119], %266 {strides = array<i32>} : memref<8x128xf32, #tpu.memory_space<vmem>>, vector<8x128xf32>,
    %269 = arith.index_cast %237 : i32 to index
    %c0_120 = arith.constant 0 : index
    %270 = vector.load %arg7[%269, %c0_120] : memref<64x128xf32, #tpu.memory_space<vmem>>, vector<8x128xf32>
    tpu.vector_store %arg7[%269, %c0_120], %266 {strides = array<i32>} : memref<64x128xf32, #tpu.memory_space<vmem>>, vector<8x128xf32>,
    %c7_i32 = arith.constant 7 : i32
    %c0_121 = arith.constant 0 : index
    %c0_122 = arith.constant 0 : index
    %271 = vector.load %arg10[%c0_121, %c0_122] : memref<8x128xf32, #tpu.memory_space<vmem>>, vector<8x128xf32>
    %c0_123 = arith.constant 0 : index
    %c0_124 = arith.constant 0 : index
    %272 = vector.load %arg11[%c0_123, %c0_124] : memref<8x128xf32, #tpu.memory_space<vmem>>, vector<8x128xf32>
    %c8_i32_125 = arith.constant 8 : i32
    %273 = arith.muli %c7_i32, %c8_i32_125 : i32
    %274 = tpu.assume_multiple %273, 8 : i32
    %275 = arith.index_cast %274 : i32 to index
    %c0_126 = arith.constant 0 : index
    %276 = vector.load %arg12[%275, %c0_126] : memref<64x512xf32, #tpu.memory_space<vmem>>, vector<8x512xf32>
    %cst_127 = arith.constant dense<0.000000e+00> : vector<8x512xf32>
    %277 = tpu.matmul %271, %11, %cst_127 {dimension_numbers = #tpu.dot_dimension_numbers<[1], [0], [0], [1], [0, 0, 1, 1], [], []>} : vector<8x128xf32>, vector<128x512xf32>, vector<8x512xf32> -> vector<8x512xf32>
    %278 = arith.addf %276, %277 : vector<8x512xf32>
    %279 = vector.extract_strided_slice %278 {offsets = [0, 0], sizes = [8, 128], strides = [1, 1]} : vector<8x512xf32> to vector<8x128xf32>
    %280 = arith.negf %279 : vector<8x128xf32>
    %281 = math.exp %280 : vector<8x128xf32>
    %cst_128 = arith.constant 1.000000e+00 : f32
    %282 = vector.broadcast %cst_128 : f32 to vector<8x128xf32>
    %283 = arith.addf %282, %281 : vector<8x128xf32>
    %284 = arith.divf %282, %283 : vector<8x128xf32>
    %285 = vector.extract_strided_slice %278 {offsets = [0, 128], sizes = [8, 128], strides = [1, 1]} : vector<8x512xf32> to vector<8x128xf32>
    %286 = arith.negf %285 : vector<8x128xf32>
    %287 = math.exp %286 : vector<8x128xf32>
    %cst_129 = arith.constant 1.000000e+00 : f32
    %288 = vector.broadcast %cst_129 : f32 to vector<8x128xf32>
    %289 = arith.addf %288, %287 : vector<8x128xf32>
    %290 = arith.divf %288, %289 : vector<8x128xf32>
    %291 = vector.extract_strided_slice %278 {offsets = [0, 256], sizes = [8, 128], strides = [1, 1]} : vector<8x512xf32> to vector<8x128xf32>
    %292 = math.tanh %291 : vector<8x128xf32>
    %293 = vector.extract_strided_slice %278 {offsets = [0, 384], sizes = [8, 128], strides = [1, 1]} : vector<8x512xf32> to vector<8x128xf32>
    %294 = arith.negf %293 : vector<8x128xf32>
    %295 = math.exp %294 : vector<8x128xf32>
    %cst_130 = arith.constant 1.000000e+00 : f32
    %296 = vector.broadcast %cst_130 : f32 to vector<8x128xf32>
    %297 = arith.addf %296, %295 : vector<8x128xf32>
    %298 = arith.divf %296, %297 : vector<8x128xf32>
    %299 = arith.mulf %290, %272 : vector<8x128xf32>
    %300 = arith.mulf %284, %292 : vector<8x128xf32>
    %301 = arith.addf %299, %300 : vector<8x128xf32>
    %302 = math.tanh %301 : vector<8x128xf32>
    %303 = arith.mulf %298, %302 : vector<8x128xf32>
    %c0_131 = arith.constant 0 : index
    %c0_132 = arith.constant 0 : index
    %304 = vector.load %arg11[%c0_131, %c0_132] : memref<8x128xf32, #tpu.memory_space<vmem>>, vector<8x128xf32>
    tpu.vector_store %arg11[%c0_131, %c0_132], %301 {strides = array<i32>} : memref<8x128xf32, #tpu.memory_space<vmem>>, vector<8x128xf32>,
    %c0_133 = arith.constant 0 : index
    %c0_134 = arith.constant 0 : index
    %305 = vector.load %arg10[%c0_133, %c0_134] : memref<8x128xf32, #tpu.memory_space<vmem>>, vector<8x128xf32>
    tpu.vector_store %arg10[%c0_133, %c0_134], %303 {strides = array<i32>} : memref<8x128xf32, #tpu.memory_space<vmem>>, vector<8x128xf32>,
    %306 = arith.index_cast %274 : i32 to index
    %c0_135 = arith.constant 0 : index
    %307 = vector.load %arg7[%306, %c0_135] : memref<64x128xf32, #tpu.memory_space<vmem>>, vector<8x128xf32>
    tpu.vector_store %arg7[%306, %c0_135], %303 {strides = array<i32>} : memref<64x128xf32, #tpu.memory_space<vmem>>, vector<8x128xf32>,
    %c8_i32_136 = arith.constant 8 : i32
    %c0_137 = arith.constant 0 : index
    %c0_138 = arith.constant 0 : index
    %308 = vector.load %arg10[%c0_137, %c0_138] : memref<8x128xf32, #tpu.memory_space<vmem>>, vector<8x128xf32>
    %c0_139 = arith.constant 0 : index
    %c0_140 = arith.constant 0 : index
    %309 = vector.load %arg8[%c0_139, %c0_140] : memref<8x128xf32, #tpu.memory_space<vmem>>, vector<8x128xf32>
    tpu.vector_store %arg8[%c0_139, %c0_140], %308 {strides = array<i32>} : memref<8x128xf32, #tpu.memory_space<vmem>>, vector<8x128xf32>,
    %c0_141 = arith.constant 0 : index
    %c0_142 = arith.constant 0 : index
    %310 = vector.load %arg11[%c0_141, %c0_142] : memref<8x128xf32, #tpu.memory_space<vmem>>, vector<8x128xf32>
    %c0_143 = arith.constant 0 : index
    %c0_144 = arith.constant 0 : index
    %311 = vector.load %arg9[%c0_143, %c0_144] : memref<8x128xf32, #tpu.memory_space<vmem>>, vector<8x128xf32>
    tpu.vector_store %arg9[%c0_143, %c0_144], %310 {strides = array<i32>} : memref<8x128xf32, #tpu.memory_space<vmem>>, vector<8x128xf32>,
    return
  }
  func.func @transform_0(%arg0: i32) -> (i32, i32) {
    %c0_i32 = arith.constant 0 : i32
    %c0_i32_0 = arith.constant 0 : i32
    %c0_i32_1 = arith.constant 0 : i32
    return %c0_i32, %c0_i32_0 : i32, i32
  }
  func.func @transform_1(%arg0: i32) -> (i32, i32) {
    %c0_i32 = arith.constant 0 : i32
    %c0_i32_0 = arith.constant 0 : i32
    %c0_i32_1 = arith.constant 0 : i32
    return %c0_i32, %c0_i32_0 : i32, i32
  }
  func.func @transform_2(%arg0: i32) -> (i32, i32) {
    %c0_i32 = arith.constant 0 : i32
    %c0_i32_0 = arith.constant 0 : i32
    %c0_i32_1 = arith.constant 0 : i32
    return %c0_i32, %c0_i32_0 : i32, i32
  }
  func.func @transform_3(%arg0: i32) -> (i32, i32) {
    %c0_i32 = arith.constant 0 : i32
    %c0_i32_0 = arith.constant 0 : i32
    %c0_i32_1 = arith.constant 0 : i32
    return %c0_i32, %c0_i32_0 : i32, i32
  }
  func.func @transform_4(%arg0: i32) -> (i32, i32) {
    %c0_i32 = arith.constant 0 : i32
    %c0_i32_0 = arith.constant 0 : i32
    %c0_i32_1 = arith.constant 0 : i32
    return %c0_i32, %c0_i32_0 : i32, i32
  }
  func.func @transform_5(%arg0: i32) -> (i32, i32) {
    %c0_i32 = arith.constant 0 : i32
    %c0_i32_0 = arith.constant 0 : i32
    %c0_i32_1 = arith.constant 0 : i32
    return %c0_i32, %c0_i32_0 : i32, i32
  }
  func.func @transform_6(%arg0: i32) -> (i32, i32) {
    %c0_i32 = arith.constant 0 : i32
    %c0_i32_0 = arith.constant 0 : i32
    %c0_i32_1 = arith.constant 0 : i32
    return %c0_i32, %c0_i32_0 : i32, i32
  }
  func.func @transform_7(%arg0: i32) -> (i32, i32) {
    %c0_i32 = arith.constant 0 : i32
    %c0_i32_0 = arith.constant 0 : i32
    %c0_i32_1 = arith.constant 0 : i32
    return %c0_i32, %c0_i32_0 : i32, i32
  }
  func.func @transform_8(%arg0: i32) -> (i32, i32) {
    %c0_i32 = arith.constant 0 : i32
    %c0_i32_0 = arith.constant 0 : i32
    %c0_i32_1 = arith.constant 0 : i32
    return %c0_i32, %c0_i32_0 : i32, i32
  }
}

</mosaic_0001>

<llo_original>
// kernel: tpu_custom_call.1
$region0: #{tpu_custom_call.1}
  #allocation0 [shape = 'u32[]', space=smem, size = 0x4, offset = 0x4, fixed_abs, tag = 'smem constant byte address 0x4 - core index']
  #allocation1 [shape = 'u32[72,128]{1,0:T(1,128)}', space=vmem, size = 0x9000, scoped, tag = 'internal scratch']
  #allocation2 [shape = 'f32[8,128]{1,0:T(8,128)}', space=vmem, size = 0x1000, scoped, tag = 'scratch operand']
  #allocation3 [shape = 'f32[8,128]{1,0:T(8,128)}', space=vmem, size = 0x1000, scoped, tag = 'scratch operand']
  #allocation4 [shape = 'f32[64,512]{1,0:T(8,128)}', space=vmem, size = 0x20000, scoped, tag = 'scratch operand']
  %s0 = inlined_call_operand.hbm [shape: f32[64,128], index: 0, kind: input, shape index: {}]
  %s1 = inlined_call_operand.hbm [shape: f32[128,512], index: 1, kind: input, shape index: {}]
  %s2 = inlined_call_operand.hbm [shape: f32[128,512], index: 2, kind: input, shape index: {}]
  %s3 = inlined_call_operand.hbm [shape: f32[1,512], index: 3, kind: input, shape index: {}]
  %s4 = inlined_call_operand.hbm [shape: f32[8,128], index: 4, kind: input, shape index: {}]
  %s5 = inlined_call_operand.hbm [shape: f32[8,128], index: 5, kind: input, shape index: {}]
  %s6 = inlined_call_operand.hbm [shape: f32[64,128], index: 6, kind: output, shape index: {0}]
  %s7 = inlined_call_operand.hbm [shape: f32[8,128], index: 7, kind: output, shape index: {1}]
  %s8 = inlined_call_operand.hbm [shape: f32[8,128], index: 8, kind: output, shape index: {2}]
  %9 = xla_tuple %s6, %s7, %s8
  %s10 = sld [smem:[#allocation0]]
  $region74: #{tpu_custom_call.1} parent=0
    _
  %s12 = ssub.s32 1, %s10
  %s13 = scalar_select 0, %s12, %s10
  $region1: #{tpu_custom_call.1} parent=0
    #allocation5 [shape = 'u8[32768]{0}', space=vmem, size = 0x8000, scoped, tag = 'input window, operand 0, single buffered']
    #allocation6 [shape = 's32[1]{0}', space=sflag, size = 0x4, scoped, tag = 'scoped memory for tpu_custom_call.1']
    #allocation7 [shape = 's32[1]{0}', space=sflag, size = 0x4, scoped, tag = 'scoped memory for tpu_custom_call.1']
    #allocation8 [shape = 'u8[262144]{0}', space=vmem, size = 0x40000, scoped, tag = 'input window, operand 1, single buffered']
    #allocation9 [shape = 's32[1]{0}', space=sflag, size = 0x4, scoped, tag = 'scoped memory for tpu_custom_call.1']
    #allocation10 [shape = 'u8[262144]{0}', space=vmem, size = 0x40000, scoped, tag = 'input window, operand 2, single buffered']
    #allocation11 [shape = 'u8[2048]{0}', space=vmem, size = 0x800, scoped, tag = 'input window, operand 3, single buffered']
    #allocation12 [shape = 's32[1]{0}', space=sflag, size = 0x4, scoped, tag = 'scoped memory for tpu_custom_call.1']
    #allocation13 [shape = 'u8[4096]{0}', space=vmem, size = 0x1000, scoped, tag = 'input window, operand 4, single buffered']
    #allocation14 [shape = 'u8[4096]{0}', space=vmem, size = 0x1000, scoped, tag = 'input window, operand 5, single buffered']
    #allocation15 [shape = 's32[1]{0}', space=sflag, size = 0x4, scoped, tag = 'scoped memory for tpu_custom_call.1']
    #allocation16 [shape = 'u8[32768]{0}', space=vmem, size = 0x8000, scoped, tag = 'output window, operand 0, single buffered']
    #allocation17 [shape = 'u8[4096]{0}', space=vmem, size = 0x1000, scoped, tag = 'output window, operand 1, single buffered']
    #allocation18 [shape = 's32[1]{0}', space=sflag, size = 0x4, scoped, tag = 'scoped memory for tpu_custom_call.1']
    #allocation19 [shape = 'u8[4096]{0}', space=vmem, size = 0x1000, scoped, tag = 'output window, operand 2, single buffered']
    %14 = vsyncpa [#allocation6], 0
    %15 = vsyncpa [#allocation9], 0
    %16 = vsyncpa [#allocation12], 0
    %17 = vsyncpa [#allocation15], 0
    %18 = vsyncpa [#allocation7], 0
    %19 = vsyncpa [#allocation18], 0
    // Predicated region
    $region2: #{tpu_custom_call.1} parent=1 // pred_check
      _
    $region3: #{tpu_custom_call.1} parent=1 // pred_check_branch
      %21 = sbr.rel (0) target = $region5
    $region4: #{tpu_custom_call.1} parent=1 // pred_region
      %23 = vsyncadd [#allocation6], 0
      %s24 = sshll.u32 %s0, 4
      %s25 = int_to_ptr.hbm [resolvable:$true] %s24
      %s26 = sshll.u32 [#allocation5], 4
      %s27 = int_to_ptr.vmem [resolvable:$true] %s26
      %32 = dma.hbm_to_vmem [thread:$0]  %s25, 1024, %s27, [#allocation6], 128, 128, 8
    $region5: #{tpu_custom_call.1} parent=1 // pred_fallthru
      _
    // Predicated region
    $region6: #{tpu_custom_call.1} parent=1 // pred_check
      _
    $region7: #{tpu_custom_call.1} parent=1 // pred_check_branch
      %34 = sbr.rel (0) target = $region9
    $region8: #{tpu_custom_call.1} parent=1 // pred_region
      %36 = vsyncadd [#allocation9], 0
      %s37 = sshll.u32 %s1, 4
      %s38 = int_to_ptr.hbm [resolvable:$true] %s37
      %s39 = sshll.u32 [#allocation8], 4
      %s40 = int_to_ptr.vmem [resolvable:$true] %s39
      %45 = dma.hbm_to_vmem [thread:$0]  %s38, 8192, %s40, [#allocation9], 512, 512, 32
    $region9: #{tpu_custom_call.1} parent=1 // pred_fallthru
      _
    // Predicated region
    $region10: #{tpu_custom_call.1} parent=1 // pred_check
      _
    $region11: #{tpu_custom_call.1} parent=1 // pred_check_branch
      %47 = sbr.rel (0) target = $region13
    $region12: #{tpu_custom_call.1} parent=1 // pred_region
      %49 = vsyncadd [#allocation9], 0
      %s50 = sshll.u32 %s2, 4
      %s51 = int_to_ptr.hbm [resolvable:$true] %s50
      %s52 = sshll.u32 [#allocation10], 4
      %s53 = int_to_ptr.vmem [resolvable:$true] %s52
      %58 = dma.hbm_to_vmem [thread:$0]  %s51, 8192, %s53, [#allocation9], 512, 512, 32
    $region13: #{tpu_custom_call.1} parent=1 // pred_fallthru
      _
    // Predicated region
    $region14: #{tpu_custom_call.1} parent=1 // pred_check
      _
    $region15: #{tpu_custom_call.1} parent=1 // pred_check_branch
      %60 = sbr.rel (0) target = $region17
    $region16: #{tpu_custom_call.1} parent=1 // pred_region
      %62 = vsyncadd [#allocation12], 0
      %s64 = sshll.u32 %s3, 4
      %s65 = int_to_ptr.hbm [resolvable:$true] %s64
      %s66 = sshll.u32 [#allocation11], 4
      %s67 = int_to_ptr.vmem [resolvable:$true] %s66
      %69 = dma.hbm_to_vmem [thread:$0]  %s65, 64, %s67, [#allocation12]
    $region17: #{tpu_custom_call.1} parent=1 // pred_fallthru
      _
    // Predicated region
    $region18: #{tpu_custom_call.1} parent=1 // pred_check
      _
    $region19: #{tpu_custom_call.1} parent=1 // pred_check_branch
      %71 = sbr.rel (0) target = $region21
    $region20: #{tpu_custom_call.1} parent=1 // pred_region
      %73 = vsyncadd [#allocation12], 0
      %s75 = sshll.u32 %s4, 4
      %s76 = int_to_ptr.hbm [resolvable:$true] %s75
      %s77 = sshll.u32 [#allocation13], 4
      %s78 = int_to_ptr.vmem [resolvable:$true] %s77
      %80 = dma.hbm_to_vmem [thread:$0]  %s76, 128, %s78, [#allocation12]
    $region21: #{tpu_custom_call.1} parent=1 // pred_fallthru
      _
    // Predicated region
    $region22: #{tpu_custom_call.1} parent=1 // pred_check
      _
    $region23: #{tpu_custom_call.1} parent=1 // pred_check_branch
      %82 = sbr.rel (0) target = $region25
    $region24: #{tpu_custom_call.1} parent=1 // pred_region
      %84 = vsyncadd [#allocation15], 0
      %s86 = sshll.u32 %s5, 4
      %s87 = int_to_ptr.hbm [resolvable:$true] %s86
      %s88 = sshll.u32 [#allocation14], 4
      %s89 = int_to_ptr.vmem [resolvable:$true] %s88
      %91 = dma.hbm_to_vmem [thread:$0]  %s87, 128, %s89, [#allocation15]
    $region25: #{tpu_custom_call.1} parent=1 // pred_fallthru
      _
    // Predicated region
    $region26: #{tpu_custom_call.1} parent=1 // pred_check
      _
    $region27: #{tpu_custom_call.1} parent=1 // pred_check_branch
      %93 = sbr.rel (0) target = $region29
    $region28: #{tpu_custom_call.1} parent=1 // pred_region
      %95 = dma.done [#allocation6], 1024
    $region29: #{tpu_custom_call.1} parent=1 // pred_fallthru
      _
    // Predicated region
    $region30: #{tpu_custom_call.1} parent=1 // pred_check
      _
    $region31: #{tpu_custom_call.1} parent=1 // pred_check_branch
      %97 = sbr.rel (0) target = $region33
    $region32: #{tpu_custom_call.1} parent=1 // pred_region
      %99 = dma.done [#allocation9], 8192
    $region33: #{tpu_custom_call.1} parent=1 // pred_fallthru
      _
    // Predicated region
    $region34: #{tpu_custom_call.1} parent=1 // pred_check
      _
    $region35: #{tpu_custom_call.1} parent=1 // pred_check_branch
      %101 = sbr.rel (0) target = $region37
    $region36: #{tpu_custom_call.1} parent=1 // pred_region
      %103 = dma.done [#allocation9], 8192
    $region37: #{tpu_custom_call.1} parent=1 // pred_fallthru
      _
    // Predicated region
    $region38: #{tpu_custom_call.1} parent=1 // pred_check
      _
    $region39: #{tpu_custom_call.1} parent=1 // pred_check_branch
      %105 = sbr.rel (0) target = $region41
    $region40: #{tpu_custom_call.1} parent=1 // pred_region
      %107 = dma.done [#allocation12], 64
    $region41: #{tpu_custom_call.1} parent=1 // pred_fallthru
      _
    // Predicated region
    $region42: #{tpu_custom_call.1} parent=1 // pred_check
      _
    $region43: #{tpu_custom_call.1} parent=1 // pred_check_branch
      %109 = sbr.rel (0) target = $region45
    $region44: #{tpu_custom_call.1} parent=1 // pred_region
      %111 = dma.done [#allocation12], 128
    $region45: #{tpu_custom_call.1} parent=1 // pred_fallthru
      _
    // Predicated region
    $region46: #{tpu_custom_call.1} parent=1 // pred_check
      _
    $region47: #{tpu_custom_call.1} parent=1 // pred_check_branch
      %113 = sbr.rel (0) target = $region49
    $region48: #{tpu_custom_call.1} parent=1 // pred_region
      %115 = dma.done [#allocation15], 128
    $region49: #{tpu_custom_call.1} parent=1 // pred_fallthru
      _
    %v116 = vld [vmem:[#allocation5] sm:$0xff]
    %v117 = vld [vmem:[#allocation5 + $0x8] sm:$0xff]
    %v118 = vld [vmem:[#allocation5 + $0x10] sm:$0xff]
    %v119 = vld [vmem:[#allocation5 + $0x18] sm:$0xff]
    %v120 = vld [vmem:[#allocation5 + $0x20] sm:$0xff]
    %v121 = vld [vmem:[#allocation5 + $0x28] sm:$0xff]
    %v122 = vld [vmem:[#allocation5 + $0x30] sm:$0xff]
    %v123 = vld [vmem:[#allocation5 + $0x38] sm:$0xff]
    %v124 = vld [vmem:[#allocation8] sm:$0xff]
    %v125 = vld [vmem:[#allocation8 + $0x8] sm:$0xff]
    %v126 = vld [vmem:[#allocation8 + $0x10] sm:$0xff]
    %v127 = vld [vmem:[#allocation8 + $0x18] sm:$0xff]
    %v128 = vld [vmem:[#allocation8 + $0x20] sm:$0xff]
    %v129 = vld [vmem:[#allocation8 + $0x28] sm:$0xff]
    %v130 = vld [vmem:[#allocation8 + $0x30] sm:$0xff]
    %v131 = vld [vmem:[#allocation8 + $0x38] sm:$0xff]
    %v132 = vld [vmem:[#allocation8 + $0x40] sm:$0xff]
    %v133 = vld [vmem:[#allocation8 + $0x48] sm:$0xff]
    %v134 = vld [vmem:[#allocation8 + $0x50] sm:$0xff]
    %v135 = vld [vmem:[#allocation8 + $0x58] sm:$0xff]
    %v136 = vld [vmem:[#allocation8 + $0x60] sm:$0xff]
    %v137 = vld [vmem:[#allocation8 + $0x68] sm:$0xff]
    %v138 = vld [vmem:[#allocation8 + $0x70] sm:$0xff]
    %v139 = vld [vmem:[#allocation8 + $0x78] sm:$0xff]
    %v140 = vld [vmem:[#allocation8 + $0x80] sm:$0xff]
    %v141 = vld [vmem:[#allocation8 + $0x88] sm:$0xff]
    %v142 = vld [vmem:[#allocation8 + $0x90] sm:$0xff]
    %v143 = vld [vmem:[#allocation8 + $0x98] sm:$0xff]
    %v144 = vld [vmem:[#allocation8 + $0xa0] sm:$0xff]
    %v145 = vld [vmem:[#allocation8 + $0xa8] sm:$0xff]
    %v146 = vld [vmem:[#allocation8 + $0xb0] sm:$0xff]
    %v147 = vld [vmem:[#allocation8 + $0xb8] sm:$0xff]
    %v148 = vld [vmem:[#allocation8 + $0xc0] sm:$0xff]
    %v149 = vld [vmem:[#allocation8 + $0xc8] sm:$0xff]
    %v150 = vld [vmem:[#allocation8 + $0xd0] sm:$0xff]
    %v151 = vld [vmem:[#allocation8 + $0xd8] sm:$0xff]
    %v152 = vld [vmem:[#allocation8 + $0xe0] sm:$0xff]
    %v153 = vld [vmem:[#allocation8 + $0xe8] sm:$0xff]
    %v154 = vld [vmem:[#allocation8 + $0xf0] sm:$0xff]
    %v155 = vld [vmem:[#allocation8 + $0xf8] sm:$0xff]
    %v156 = vld [vmem:[#allocation8 + $0x100] sm:$0xff]
    %v157 = vld [vmem:[#allocation8 + $0x108] sm:$0xff]
    %v158 = vld [vmem:[#allocation8 + $0x110] sm:$0xff]
    %v159 = vld [vmem:[#allocation8 + $0x118] sm:$0xff]
    %v160 = vld [vmem:[#allocation8 + $0x120] sm:$0xff]
    %v161 = vld [vmem:[#allocation8 + $0x128] sm:$0xff]
    %v162 = vld [vmem:[#allocation8 + $0x130] sm:$0xff]
    %v163 = vld [vmem:[#allocation8 + $0x138] sm:$0xff]
    %v164 = vld [vmem:[#allocation8 + $0x140] sm:$0xff]
    %v165 = vld [vmem:[#allocation8 + $0x148] sm:$0xff]
    %v166 = vld [vmem:[#allocation8 + $0x150] sm:$0xff]
    %v167 = vld [vmem:[#allocation8 + $0x158] sm:$0xff]
    %v168 = vld [vmem:[#allocation8 + $0x160] sm:$0xff]
    %v169 = vld [vmem:[#allocation8 + $0x168] sm:$0xff]
    %v170 = vld [vmem:[#allocation8 + $0x170] sm:$0xff]
    %v171 = vld [vmem:[#allocation8 + $0x178] sm:$0xff]
    %v172 = vld [vmem:[#allocation8 + $0x180] sm:$0xff]
    %v173 = vld [vmem:[#allocation8 + $0x188] sm:$0xff]
    %v174 = vld [vmem:[#allocation8 + $0x190] sm:$0xff]
    %v175 = vld [vmem:[#allocation8 + $0x198] sm:$0xff]
    %v176 = vld [vmem:[#allocation8 + $0x1a0] sm:$0xff]
    %v177 = vld [vmem:[#allocation8 + $0x1a8] sm:$0xff]
    %v178 = vld [vmem:[#allocation8 + $0x1b0] sm:$0xff]
    %v179 = vld [vmem:[#allocation8 + $0x1b8] sm:$0xff]
    %v180 = vld [vmem:[#allocation8 + $0x1c0] sm:$0xff]
    %v181 = vld [vmem:[#allocation8 + $0x1c8] sm:$0xff]
    %v182 = vld [vmem:[#allocation8 + $0x1d0] sm:$0xff]
    %v183 = vld [vmem:[#allocation8 + $0x1d8] sm:$0xff]
    %v184 = vld [vmem:[#allocation8 + $0x1e0] sm:$0xff]
    %v185 = vld [vmem:[#allocation8 + $0x1e8] sm:$0xff]
    %v186 = vld [vmem:[#allocation8 + $0x1f0] sm:$0xff]
    %v187 = vld [vmem:[#allocation8 + $0x1f8] sm:$0xff]
    %v188 = vld [vmem:[#allocation11] sm:$0xf]
    %v190 = vperm.slane %v188, 0
    %v191 = vperm.slane %v188, 1
    %v192 = vperm.slane %v188, 2
    %v193 = vperm.slane %v188, 3
    %198 = vmatpush.msra.mxu0 %v184
    %199 = vmatpush.msra.mxu0 %v180
    %200 = vmatpush.msra.mxu0 %v176
    %201 = vmatpush.msra.mxu0 %v172
    %202 = vmatpush.msra.mxu0 %v168
    %203 = vmatpush.msra.mxu0 %v164
    %204 = vmatpush.msra.mxu0 %v160
    %205 = vmatpush.msra.mxu0 %v156
    %206 = vmatpush.msra.mxu0 %v152
    %207 = vmatpush.msra.mxu0 %v148
    %208 = vmatpush.msra.mxu0 %v144
    %209 = vmatpush.msra.mxu0 %v140
    %210 = vmatpush.msra.mxu0 %v136
    %211 = vmatpush.msra.mxu0 %v132
    %212 = vmatpush.msra.mxu0 %v128
    %213 = vmatpush.msra.mxu0 %v124
    %214 = vmatmul.f32.gmra.mxu0 %v116
    %v215 = vpop.f32.mrf.mxu0
    %v216 = vadd.f32 %v190, %v215
    %217 = vmatmul.f32.gmra.mxu0 %v117
    %v218 = vpop.f32.mrf.mxu0
    %v219 = vadd.f32 %v190, %v218
    %220 = vmatmul.f32.gmra.mxu0 %v118
    %v221 = vpop.f32.mrf.mxu0
    %v222 = vadd.f32 %v190, %v221
    %223 = vmatmul.f32.gmra.mxu0 %v119
    %v224 = vpop.f32.mrf.mxu0
    %v225 = vadd.f32 %v190, %v224
    %226 = vmatmul.f32.gmra.mxu0 %v120
    %v227 = vpop.f32.mrf.mxu0
    %v228 = vadd.f32 %v190, %v227
    %229 = vmatmul.f32.gmra.mxu0 %v121
    %v230 = vpop.f32.mrf.mxu0
    %v231 = vadd.f32 %v190, %v230
    %232 = vmatmul.f32.gmra.mxu0 %v122
    %v233 = vpop.f32.mrf.mxu0
    %v234 = vadd.f32 %v190, %v233
    %235 = vmatmul.f32.gmra.mxu0 %v123
    %v236 = vpop.f32.mrf.mxu0
    %v237 = vadd.f32 %v190, %v236
    %238 = vdwg.mxu0
    %239 = vmatpush.msra.mxu0 %v185
    %240 = vmatpush.msra.mxu0 %v181
    %241 = vmatpush.msra.mxu0 %v177
    %242 = vmatpush.msra.mxu0 %v173
    %243 = vmatpush.msra.mxu0 %v169
    %244 = vmatpush.msra.mxu0 %v165
    %245 = vmatpush.msra.mxu0 %v161
    %246 = vmatpush.msra.mxu0 %v157
    %247 = vmatpush.msra.mxu0 %v153
    %248 = vmatpush.msra.mxu0 %v149
    %249 = vmatpush.msra.mxu0 %v145
    %250 = vmatpush.msra.mxu0 %v141
    %251 = vmatpush.msra.mxu0 %v137
    %252 = vmatpush.msra.mxu0 %v133
    %253 = vmatpush.msra.mxu0 %v129
    %254 = vmatpush.msra.mxu0 %v125
    %255 = vmatmul.f32.gmra.mxu0 %v116
    %v256 = vpop.f32.mrf.mxu0
    %v257 = vadd.f32 %v191, %v256
    %258 = vmatmul.f32.gmra.mxu0 %v117
    %v259 = vpop.f32.mrf.mxu0
    %v260 = vadd.f32 %v191, %v259
    %261 = vmatmul.f32.gmra.mxu0 %v118
    %v262 = vpop.f32.mrf.mxu0
    %v263 = vadd.f32 %v191, %v262
    %264 = vmatmul.f32.gmra.mxu0 %v119
    %v265 = vpop.f32.mrf.mxu0
    %v266 = vadd.f32 %v191, %v265
    %267 = vmatmul.f32.gmra.mxu0 %v120
    %v268 = vpop.f32.mrf.mxu0
    %v269 = vadd.f32 %v191, %v268
    %270 = vmatmul.f32.gmra.mxu0 %v121
    %v271 = vpop.f32.mrf.mxu0
    %v272 = vadd.f32 %v191, %v271
    %273 = vmatmul.f32.gmra.mxu0 %v122
    %v274 = vpop.f32.mrf.mxu0
    %v275 = vadd.f32 %v191, %v274
    %276 = vmatmul.f32.gmra.mxu0 %v123
    %v277 = vpop.f32.mrf.mxu0
    %v278 = vadd.f32 %v191, %v277
    %279 = vdwg.mxu0
    %280 = vmatpush.msra.mxu0 %v186
    %281 = vmatpush.msra.mxu0 %v182
    %282 = vmatpush.msra.mxu0 %v178
    %283 = vmatpush.msra.mxu0 %v174
    %284 = vmatpush.msra.mxu0 %v170
    %285 = vmatpush.msra.mxu0 %v166
    %286 = vmatpush.msra.mxu0 %v162
    %287 = vmatpush.msra.mxu0 %v158
    %288 = vmatpush.msra.mxu0 %v154
    %289 = vmatpush.msra.mxu0 %v150
    %290 = vmatpush.msra.mxu0 %v146
    %291 = vmatpush.msra.mxu0 %v142
    %292 = vmatpush.msra.mxu0 %v138
    %293 = vmatpush.msra.mxu0 %v134
    %294 = vmatpush.msra.mxu0 %v130
    %295 = vmatpush.msra.mxu0 %v126
    %296 = vmatmul.f32.gmra.mxu0 %v116
    %v297 = vpop.f32.mrf.mxu0
    %v298 = vadd.f32 %v192, %v297
    %299 = vmatmul.f32.gmra.mxu0 %v117
    %v300 = vpop.f32.mrf.mxu0
    %v301 = vadd.f32 %v192, %v300
    %302 = vmatmul.f32.gmra.mxu0 %v118
    %v303 = vpop.f32.mrf.mxu0
    %v304 = vadd.f32 %v192, %v303
    %305 = vmatmul.f32.gmra.mxu0 %v119
    %v306 = vpop.f32.mrf.mxu0
    %v307 = vadd.f32 %v192, %v306
    %308 = vmatmul.f32.gmra.mxu0 %v120
    %v309 = vpop.f32.mrf.mxu0
    %v310 = vadd.f32 %v192, %v309
    %311 = vmatmul.f32.gmra.mxu0 %v121
    %v312 = vpop.f32.mrf.mxu0
    %v313 = vadd.f32 %v192, %v312
    %314 = vmatmul.f32.gmra.mxu0 %v122
    %v315 = vpop.f32.mrf.mxu0
    %v316 = vadd.f32 %v192, %v315
    %317 = vmatmul.f32.gmra.mxu0 %v123
    %v318 = vpop.f32.mrf.mxu0
    %v319 = vadd.f32 %v192, %v318
    %320 = vdwg.mxu0
    %321 = vmatpush.msra.mxu0 %v187
    %322 = vmatpush.msra.mxu0 %v183
    %323 = vmatpush.msra.mxu0 %v179
    %324 = vmatpush.msra.mxu0 %v175
    %325 = vmatpush.msra.mxu0 %v171
    %326 = vmatpush.msra.mxu0 %v167
    %327 = vmatpush.msra.mxu0 %v163
    %328 = vmatpush.msra.mxu0 %v159
    %329 = vmatpush.msra.mxu0 %v155
    %330 = vmatpush.msra.mxu0 %v151
    %331 = vmatpush.msra.mxu0 %v147
    %332 = vmatpush.msra.mxu0 %v143
    %333 = vmatpush.msra.mxu0 %v139
    %334 = vmatpush.msra.mxu0 %v135
    %335 = vmatpush.msra.mxu0 %v131
    %336 = vmatpush.msra.mxu0 %v127
    %337 = vmatmul.f32.gmra.mxu0 %v116
    %v338 = vpop.f32.mrf.mxu0
    %v339 = vadd.f32 %v193, %v338
    %340 = vmatmul.f32.gmra.mxu0 %v117
    %v341 = vpop.f32.mrf.mxu0
    %v342 = vadd.f32 %v193, %v341
    %343 = vmatmul.f32.gmra.mxu0 %v118
    %v344 = vpop.f32.mrf.mxu0
    %v345 = vadd.f32 %v193, %v344
    %346 = vmatmul.f32.gmra.mxu0 %v119
    %v347 = vpop.f32.mrf.mxu0
    %v348 = vadd.f32 %v193, %v347
    %349 = vmatmul.f32.gmra.mxu0 %v120
    %v350 = vpop.f32.mrf.mxu0
    %v351 = vadd.f32 %v193, %v350
    %352 = vmatmul.f32.gmra.mxu0 %v121
    %v353 = vpop.f32.mrf.mxu0
    %v354 = vadd.f32 %v193, %v353
    %355 = vmatmul.f32.gmra.mxu0 %v122
    %v356 = vpop.f32.mrf.mxu0
    %v357 = vadd.f32 %v193, %v356
    %358 = vmatmul.f32.gmra.mxu0 %v123
    %v359 = vpop.f32.mrf.mxu0
    %v360 = vadd.f32 %v193, %v359
    %361 = vdwg.mxu0
    %362 = vst [vmem:[#allocation4] sm:$0xff] %v216
    %363 = vst [vmem:[#allocation4 + $0x8] sm:$0xff] %v257
    %364 = vst [vmem:[#allocation4 + $0x10] sm:$0xff] %v298
    %365 = vst [vmem:[#allocation4 + $0x18] sm:$0xff] %v339
    %366 = vst [vmem:[#allocation4 + $0x20] sm:$0xff] %v219
    %367 = vst [vmem:[#allocation4 + $0x28] sm:$0xff] %v260
    %368 = vst [vmem:[#allocation4 + $0x30] sm:$0xff] %v301
    %369 = vst [vmem:[#allocation4 + $0x38] sm:$0xff] %v342
    %370 = vst [vmem:[#allocation4 + $0x40] sm:$0xff] %v222
    %371 = vst [vmem:[#allocation4 + $0x48] sm:$0xff] %v263
    %372 = vst [vmem:[#allocation4 + $0x50] sm:$0xff] %v304
    %373 = vst [vmem:[#allocation4 + $0x58] sm:$0xff] %v345
    %374 = vst [vmem:[#allocation4 + $0x60] sm:$0xff] %v225
    %375 = vst [vmem:[#allocation4 + $0x68] sm:$0xff] %v266
    %376 = vst [vmem:[#allocation4 + $0x70] sm:$0xff] %v307
    %377 = vst [vmem:[#allocation4 + $0x78] sm:$0xff] %v348
    %378 = vst [vmem:[#allocation4 + $0x80] sm:$0xff] %v228
    %379 = vst [vmem:[#allocation4 + $0x88] sm:$0xff] %v269
    %380 = vst [vmem:[#allocation4 + $0x90] sm:$0xff] %v310
    %381 = vst [vmem:[#allocation4 + $0x98] sm:$0xff] %v351
    %382 = vst [vmem:[#allocation4 + $0xa0] sm:$0xff] %v231
    %383 = vst [vmem:[#allocation4 + $0xa8] sm:$0xff] %v272
    %384 = vst [vmem:[#allocation4 + $0xb0] sm:$0xff] %v313
    %385 = vst [vmem:[#allocation4 + $0xb8] sm:$0xff] %v354
    %386 = vst [vmem:[#allocation4 + $0xc0] sm:$0xff] %v234
    %387 = vst [vmem:[#allocation4 + $0xc8] sm:$0xff] %v275
    %388 = vst [vmem:[#allocation4 + $0xd0] sm:$0xff] %v316
    %389 = vst [vmem:[#allocation4 + $0xd8] sm:$0xff] %v357
    %390 = vst [vmem:[#allocation4 + $0xe0] sm:$0xff] %v237
    %391 = vst [vmem:[#allocation4 + $0xe8] sm:$0xff] %v278
    %392 = vst [vmem:[#allocation4 + $0xf0] sm:$0xff] %v319
    %393 = vst [vmem:[#allocation4 + $0xf8] sm:$0xff] %v360
    %v394 = vld [vmem:[#allocation13] sm:$0xff]
    %395 = vst [vmem:[#allocation2] sm:$0xff] %v394
    %v396 = vld [vmem:[#allocation14] sm:$0xff]
    %397 = vst [vmem:[#allocation3] sm:$0xff] %v396
    %v398 = vld [vmem:[#allocation10] sm:$0xff]
    %v399 = vld [vmem:[#allocation10 + $0x8] sm:$0xff]
    %v400 = vld [vmem:[#allocation10 + $0x10] sm:$0xff]
    %v401 = vld [vmem:[#allocation10 + $0x18] sm:$0xff]
    %v402 = vld [vmem:[#allocation10 + $0x20] sm:$0xff]
    %v403 = vld [vmem:[#allocation10 + $0x28] sm:$0xff]
    %v404 = vld [vmem:[#allocation10 + $0x30] sm:$0xff]
    %v405 = vld [vmem:[#allocation10 + $0x38] sm:$0xff]
    %v406 = vld [vmem:[#allocation10 + $0x40] sm:$0xff]
    %v407 = vld [vmem:[#allocation10 + $0x48] sm:$0xff]
    %v408 = vld [vmem:[#allocation10 + $0x50] sm:$0xff]
    %v409 = vld [vmem:[#allocation10 + $0x58] sm:$0xff]
    %v410 = vld [vmem:[#allocation10 + $0x60] sm:$0xff]
    %v411 = vld [vmem:[#allocation10 + $0x68] sm:$0xff]
    %v412 = vld [vmem:[#allocation10 + $0x70] sm:$0xff]
    %v413 = vld [vmem:[#allocation10 + $0x78] sm:$0xff]
    %v414 = vld [vmem:[#allocation10 + $0x80] sm:$0xff]
    %v415 = vld [vmem:[#allocation10 + $0x88] sm:$0xff]
    %v416 = vld [vmem:[#allocation10 + $0x90] sm:$0xff]
    %v417 = vld [vmem:[#allocation10 + $0x98] sm:$0xff]
    %v418 = vld [vmem:[#allocation10 + $0xa0] sm:$0xff]
    %v419 = vld [vmem:[#allocation10 + $0xa8] sm:$0xff]
    %v420 = vld [vmem:[#allocation10 + $0xb0] sm:$0xff]
    %v421 = vld [vmem:[#allocation10 + $0xb8] sm:$0xff]
    %v422 = vld [vmem:[#allocation10 + $0xc0] sm:$0xff]
    %v423 = vld [vmem:[#allocation10 + $0xc8] sm:$0xff]
    %v424 = vld [vmem:[#allocation10 + $0xd0] sm:$0xff]
    %v425 = vld [vmem:[#allocation10 + $0xd8] sm:$0xff]
    %v426 = vld [vmem:[#allocation10 + $0xe0] sm:$0xff]
    %v427 = vld [vmem:[#allocation10 + $0xe8] sm:$0xff]
    %v428 = vld [vmem:[#allocation10 + $0xf0] sm:$0xff]
    %v429 = vld [vmem:[#allocation10 + $0xf8] sm:$0xff]
    %v430 = vld [vmem:[#allocation10 + $0x100] sm:$0xff]
    %v431 = vld [vmem:[#allocation10 + $0x108] sm:$0xff]
    %v432 = vld [vmem:[#allocation10 + $0x110] sm:$0xff]
    %v433 = vld [vmem:[#allocation10 + $0x118] sm:$0xff]
    %v434 = vld [vmem:[#allocation10 + $0x120] sm:$0xff]
    %v435 = vld [vmem:[#allocation10 + $0x128] sm:$0xff]
    %v436 = vld [vmem:[#allocation10 + $0x130] sm:$0xff]
    %v437 = vld [vmem:[#allocation10 + $0x138] sm:$0xff]
    %v438 = vld [vmem:[#allocation10 + $0x140] sm:$0xff]
    %v439 = vld [vmem:[#allocation10 + $0x148] sm:$0xff]
    %v440 = vld [vmem:[#allocation10 + $0x150] sm:$0xff]
    %v441 = vld [vmem:[#allocation10 + $0x158] sm:$0xff]
    %v442 = vld [vmem:[#allocation10 + $0x160] sm:$0xff]
    %v443 = vld [vmem:[#allocation10 + $0x168] sm:$0xff]
    %v444 = vld [vmem:[#allocation10 + $0x170] sm:$0xff]
    %v445 = vld [vmem:[#allocation10 + $0x178] sm:$0xff]
    %v446 = vld [vmem:[#allocation10 + $0x180] sm:$0xff]
    %v447 = vld [vmem:[#allocation10 + $0x188] sm:$0xff]
    %v448 = vld [vmem:[#allocation10 + $0x190] sm:$0xff]
    %v449 = vld [vmem:[#allocation10 + $0x198] sm:$0xff]
    %v450 = vld [vmem:[#allocation10 + $0x1a0] sm:$0xff]
    %v451 = vld [vmem:[#allocation10 + $0x1a8] sm:$0xff]
    %v452 = vld [vmem:[#allocation10 + $0x1b0] sm:$0xff]
    %v453 = vld [vmem:[#allocation10 + $0x1b8] sm:$0xff]
    %v454 = vld [vmem:[#allocation10 + $0x1c0] sm:$0xff]
    %v455 = vld [vmem:[#allocation10 + $0x1c8] sm:$0xff]
    %v456 = vld [vmem:[#allocation10 + $0x1d0] sm:$0xff]
    %v457 = vld [vmem:[#allocation10 + $0x1d8] sm:$0xff]
    %v458 = vld [vmem:[#allocation10 + $0x1e0] sm:$0xff]
    %v459 = vld [vmem:[#allocation10 + $0x1e8] sm:$0xff]
    %v460 = vld [vmem:[#allocation10 + $0x1f0] sm:$0xff]
    %v461 = vld [vmem:[#allocation10 + $0x1f8] sm:$0xff]
    %v462 = vld [vmem:[#allocation2] sm:$0xff]
    %v463 = vld [vmem:[#allocation3] sm:$0xff]
    %s464 = smul.u32 0, 4
    %s465 = smul.addr %s464, 8
    %s466 = scalar_lea.vmem [#allocation4], %s465
    %v467 = vld [vmem:[%s466] sm:$0xff]
    %v468 = vld [vmem:[%s466 + $0x8] sm:$0xff]
    %v469 = vld [vmem:[%s466 + $0x10] sm:$0xff]
    %v470 = vld [vmem:[%s466 + $0x18] sm:$0xff]
    %471 = vmatpush.msra.mxu0 %v458
    %472 = vmatpush.msra.mxu0 %v454
    %473 = vmatpush.msra.mxu0 %v450
    %474 = vmatpush.msra.mxu0 %v446
    %475 = vmatpush.msra.mxu0 %v442
    %476 = vmatpush.msra.mxu0 %v438
    %477 = vmatpush.msra.mxu0 %v434
    %478 = vmatpush.msra.mxu0 %v430
    %479 = vmatpush.msra.mxu0 %v426
    %480 = vmatpush.msra.mxu0 %v422
    %481 = vmatpush.msra.mxu0 %v418
    %482 = vmatpush.msra.mxu0 %v414
    %483 = vmatpush.msra.mxu0 %v410
    %484 = vmatpush.msra.mxu0 %v406
    %485 = vmatpush.msra.mxu0 %v402
    %486 = vmatpush.msra.mxu0 %v398
    %487 = vmatmul.f32.gmra.mxu0 %v462
    %v488 = vpop.f32.mrf.mxu0
    %v489 = vadd.f32 0.0, %v488
    %490 = vdwg.mxu0
    %491 = vmatpush.msra.mxu0 %v459
    %492 = vmatpush.msra.mxu0 %v455
    %493 = vmatpush.msra.mxu0 %v451
    %494 = vmatpush.msra.mxu0 %v447
    %495 = vmatpush.msra.mxu0 %v443
    %496 = vmatpush.msra.mxu0 %v439
    %497 = vmatpush.msra.mxu0 %v435
    %498 = vmatpush.msra.mxu0 %v431
    %499 = vmatpush.msra.mxu0 %v427
    %500 = vmatpush.msra.mxu0 %v423
    %501 = vmatpush.msra.mxu0 %v419
    %502 = vmatpush.msra.mxu0 %v415
    %503 = vmatpush.msra.mxu0 %v411
    %504 = vmatpush.msra.mxu0 %v407
    %505 = vmatpush.msra.mxu0 %v403
    %506 = vmatpush.msra.mxu0 %v399
    %507 = vmatmul.f32.gmra.mxu0 %v462
    %v508 = vpop.f32.mrf.mxu0
    %v509 = vadd.f32 0.0, %v508
    %510 = vdwg.mxu0
    %511 = vmatpush.msra.mxu0 %v460
    %512 = vmatpush.msra.mxu0 %v456
    %513 = vmatpush.msra.mxu0 %v452
    %514 = vmatpush.msra.mxu0 %v448
    %515 = vmatpush.msra.mxu0 %v444
    %516 = vmatpush.msra.mxu0 %v440
    %517 = vmatpush.msra.mxu0 %v436
    %518 = vmatpush.msra.mxu0 %v432
    %519 = vmatpush.msra.mxu0 %v428
    %520 = vmatpush.msra.mxu0 %v424
    %521 = vmatpush.msra.mxu0 %v420
    %522 = vmatpush.msra.mxu0 %v416
    %523 = vmatpush.msra.mxu0 %v412
    %524 = vmatpush.msra.mxu0 %v408
    %525 = vmatpush.msra.mxu0 %v404
    %526 = vmatpush.msra.mxu0 %v400
    %527 = vmatmul.f32.gmra.mxu0 %v462
    %v528 = vpop.f32.mrf.mxu0
    %v529 = vadd.f32 0.0, %v528
    %530 = vdwg.mxu0
    %531 = vmatpush.msra.mxu0 %v461
    %532 = vmatpush.msra.mxu0 %v457
    %533 = vmatpush.msra.mxu0 %v453
    %534 = vmatpush.msra.mxu0 %v449
    %535 = vmatpush.msra.mxu0 %v445
    %536 = vmatpush.msra.mxu0 %v441
    %537 = vmatpush.msra.mxu0 %v437
    %538 = vmatpush.msra.mxu0 %v433
    %539 = vmatpush.msra.mxu0 %v429
    %540 = vmatpush.msra.mxu0 %v425
    %541 = vmatpush.msra.mxu0 %v421
    %542 = vmatpush.msra.mxu0 %v417
    %543 = vmatpush.msra.mxu0 %v413
    %544 = vmatpush.msra.mxu0 %v409
    %545 = vmatpush.msra.mxu0 %v405
    %546 = vmatpush.msra.mxu0 %v401
    %547 = vmatmul.f32.gmra.mxu0 %v462
    %v548 = vpop.f32.mrf.mxu0
    %v549 = vadd.f32 0.0, %v548
    %550 = vdwg.mxu0
    %v551 = vadd.f32 %v467, %v489
    %v552 = vadd.f32 %v468, %v509
    %v553 = vadd.f32 %v469, %v529
    %v554 = vadd.f32 %v470, %v549
    %v555 = vxor.u32 %v551, 2147483648
    %v556 = vmul.f32 %v555, 1.442695
    %v557 = vpow.pop %v556
    %v558 = vadd.f32 %v557, 1.0
    %v559 = vrcp.pop %v558
    %v560 = vmul.f32 %v558, %v559
    %v561 = vsub.f32 1.0, %v560
    %v562 = vmul.f32 %v559, %v561
    %v563 = vadd.f32 %v559, %v562
    %vm564 = vweird.f32 %v558
    %vm565 = vweird.f32 %v559
    %vm566 = vmor %vm564, %vm565
    %v567 = vsel %vm566, %v559, %v563
    %v568 = vand.u32 2147483647, %v558
    %vm569 = vcmp.eq.f32.partialorder %v568, 8.507059e+37
    %v570 = vand.u32 %v558, 2147483648
    %v571 = vor.u32 1.1754944e-38, %v570
    %v572 = vsel %vm569, %v571, %v567
    %v573 = vmul.f32 1.0, %v572
    %v574 = vxor.u32 %v552, 2147483648
    %v575 = vmul.f32 %v574, 1.442695
    %v576 = vpow.pop %v575
    %v577 = vadd.f32 %v576, 1.0
    %v578 = vrcp.pop %v577
    %v579 = vmul.f32 %v577, %v578
    %v580 = vsub.f32 1.0, %v579
    %v581 = vmul.f32 %v578, %v580
    %v582 = vadd.f32 %v578, %v581
    %vm583 = vweird.f32 %v577
    %vm584 = vweird.f32 %v578
    %vm585 = vmor %vm583, %vm584
    %v586 = vsel %vm585, %v578, %v582
    %v587 = vand.u32 2147483647, %v577
    %vm588 = vcmp.eq.f32.partialorder %v587, 8.507059e+37
    %v589 = vand.u32 %v577, 2147483648
    %v590 = vor.u32 1.1754944e-38, %v589
    %v591 = vsel %vm588, %v590, %v586
    %v592 = vmul.f32 1.0, %v591
    %v593 = vtanh.pop %v553
    %v594 = vxor.u32 %v554, 2147483648
    %v595 = vmul.f32 %v594, 1.442695
    %v596 = vpow.pop %v595
    %v597 = vadd.f32 %v596, 1.0
    %v598 = vrcp.pop %v597
    %v599 = vmul.f32 %v597, %v598
    %v600 = vsub.f32 1.0, %v599
    %v601 = vmul.f32 %v598, %v600
    %v602 = vadd.f32 %v598, %v601
    %vm603 = vweird.f32 %v597
    %vm604 = vweird.f32 %v598
    %vm605 = vmor %vm603, %vm604
    %v606 = vsel %vm605, %v598, %v602
    %v607 = vand.u32 2147483647, %v597
    %vm608 = vcmp.eq.f32.partialorder %v607, 8.507059e+37
    %v609 = vand.u32 %v597, 2147483648
    %v610 = vor.u32 1.1754944e-38, %v609
    %v611 = vsel %vm608, %v610, %v606
    %v612 = vmul.f32 1.0, %v611
    %v613 = vmul.f32 %v592, %v463
    %v614 = vmul.f32 %v573, %v593
    %v615 = vadd.f32 %v613, %v614
    %v616 = vtanh.pop %v615
    %v617 = vmul.f32 %v612, %v616
    %618 = vst [vmem:[#allocation3] sm:$0xff] %v615
    %619 = vst [vmem:[#allocation2] sm:$0xff] %v617
    %620 = vst [vmem:[#allocation16] sm:$0xff] %v617
    %v621 = vld [vmem:[#allocation2] sm:$0xff]
    %v622 = vld [vmem:[#allocation3] sm:$0xff]
    %s623 = smul.u32 1, 4
    %s624 = smul.addr %s623, 8
    %s625 = scalar_lea.vmem [#allocation4], %s624
    %v626 = vld [vmem:[%s625] sm:$0xff]
    %v627 = vld [vmem:[%s625 + $0x8] sm:$0xff]
    %v628 = vld [vmem:[%s625 + $0x10] sm:$0xff]
    %v629 = vld [vmem:[%s625 + $0x18] sm:$0xff]
    %630 = vmatpush.msra.mxu0 %v458
    %631 = vmatpush.msra.mxu0 %v454
    %632 = vmatpush.msra.mxu0 %v450
    %633 = vmatpush.msra.mxu0 %v446
    %634 = vmatpush.msra.mxu0 %v442
    %635 = vmatpush.msra.mxu0 %v438
    %636 = vmatpush.msra.mxu0 %v434
    %637 = vmatpush.msra.mxu0 %v430
    %638 = vmatpush.msra.mxu0 %v426
    %639 = vmatpush.msra.mxu0 %v422
    %640 = vmatpush.msra.mxu0 %v418
    %641 = vmatpush.msra.mxu0 %v414
    %642 = vmatpush.msra.mxu0 %v410
    %643 = vmatpush.msra.mxu0 %v406
    %644 = vmatpush.msra.mxu0 %v402
    %645 = vmatpush.msra.mxu0 %v398
    %646 = vmatmul.f32.gmra.mxu0 %v621
    %v647 = vpop.f32.mrf.mxu0
    %v648 = vadd.f32 0.0, %v647
    %649 = vdwg.mxu0
    %650 = vmatpush.msra.mxu0 %v459
    %651 = vmatpush.msra.mxu0 %v455
    %652 = vmatpush.msra.mxu0 %v451
    %653 = vmatpush.msra.mxu0 %v447
    %654 = vmatpush.msra.mxu0 %v443
    %655 = vmatpush.msra.mxu0 %v439
    %656 = vmatpush.msra.mxu0 %v435
    %657 = vmatpush.msra.mxu0 %v431
    %658 = vmatpush.msra.mxu0 %v427
    %659 = vmatpush.msra.mxu0 %v423
    %660 = vmatpush.msra.mxu0 %v419
    %661 = vmatpush.msra.mxu0 %v415
    %662 = vmatpush.msra.mxu0 %v411
    %663 = vmatpush.msra.mxu0 %v407
    %664 = vmatpush.msra.mxu0 %v403
    %665 = vmatpush.msra.mxu0 %v399
    %666 = vmatmul.f32.gmra.mxu0 %v621
    %v667 = vpop.f32.mrf.mxu0
    %v668 = vadd.f32 0.0, %v667
    %669 = vdwg.mxu0
    %670 = vmatpush.msra.mxu0 %v460
    %671 = vmatpush.msra.mxu0 %v456
    %672 = vmatpush.msra.mxu0 %v452
    %673 = vmatpush.msra.mxu0 %v448
    %674 = vmatpush.msra.mxu0 %v444
    %675 = vmatpush.msra.mxu0 %v440
    %676 = vmatpush.msra.mxu0 %v436
    %677 = vmatpush.msra.mxu0 %v432
    %678 = vmatpush.msra.mxu0 %v428
    %679 = vmatpush.msra.mxu0 %v424
    %680 = vmatpush.msra.mxu0 %v420
    %681 = vmatpush.msra.mxu0 %v416
    %682 = vmatpush.msra.mxu0 %v412
    %683 = vmatpush.msra.mxu0 %v408
    %684 = vmatpush.msra.mxu0 %v404
    %685 = vmatpush.msra.mxu0 %v400
    %686 = vmatmul.f32.gmra.mxu0 %v621
    %v687 = vpop.f32.mrf.mxu0
    %v688 = vadd.f32 0.0, %v687
    %689 = vdwg.mxu0
    %690 = vmatpush.msra.mxu0 %v461
    %691 = vmatpush.msra.mxu0 %v457
    %692 = vmatpush.msra.mxu0 %v453
    %693 = vmatpush.msra.mxu0 %v449
    %694 = vmatpush.msra.mxu0 %v445
    %695 = vmatpush.msra.mxu0 %v441
    %696 = vmatpush.msra.mxu0 %v437
    %697 = vmatpush.msra.mxu0 %v433
    %698 = vmatpush.msra.mxu0 %v429
    %699 = vmatpush.msra.mxu0 %v425
    %700 = vmatpush.msra.mxu0 %v421
    %701 = vmatpush.msra.mxu0 %v417
    %702 = vmatpush.msra.mxu0 %v413
    %703 = vmatpush.msra.mxu0 %v409
    %704 = vmatpush.msra.mxu0 %v405
    %705 = vmatpush.msra.mxu0 %v401
    %706 = vmatmul.f32.gmra.mxu0 %v621
    %v707 = vpop.f32.mrf.mxu0
    %v708 = vadd.f32 0.0, %v707
    %709 = vdwg.mxu0
    %v710 = vadd.f32 %v626, %v648
    %v711 = vadd.f32 %v627, %v668
    %v712 = vadd.f32 %v628, %v688
    %v713 = vadd.f32 %v629, %v708
    %v714 = vxor.u32 %v710, 2147483648
    %v715 = vmul.f32 %v714, 1.442695
    %v716 = vpow.pop %v715
    %v717 = vadd.f32 %v716, 1.0
    %v718 = vrcp.pop %v717
    %v719 = vmul.f32 %v717, %v718
    %v720 = vsub.f32 1.0, %v719
    %v721 = vmul.f32 %v718, %v720
    %v722 = vadd.f32 %v718, %v721
    %vm723 = vweird.f32 %v717
    %vm724 = vweird.f32 %v718
    %vm725 = vmor %vm723, %vm724
    %v726 = vsel %vm725, %v718, %v722
    %v727 = vand.u32 2147483647, %v717
    %vm728 = vcmp.eq.f32.partialorder %v727, 8.507059e+37
    %v729 = vand.u32 %v717, 2147483648
    %v730 = vor.u32 1.1754944e-38, %v729
    %v731 = vsel %vm728, %v730, %v726
    %v732 = vmul.f32 1.0, %v731
    %v733 = vxor.u32 %v711, 2147483648
    %v734 = vmul.f32 %v733, 1.442695
    %v735 = vpow.pop %v734
    %v736 = vadd.f32 %v735, 1.0
    %v737 = vrcp.pop %v736
    %v738 = vmul.f32 %v736, %v737
    %v739 = vsub.f32 1.0, %v738
    %v740 = vmul.f32 %v737, %v739
    %v741 = vadd.f32 %v737, %v740
    %vm742 = vweird.f32 %v736
    %vm743 = vweird.f32 %v737
    %vm744 = vmor %vm742, %vm743
    %v745 = vsel %vm744, %v737, %v741
    %v746 = vand.u32 2147483647, %v736
    %vm747 = vcmp.eq.f32.partialorder %v746, 8.507059e+37
    %v748 = vand.u32 %v736, 2147483648
    %v749 = vor.u32 1.1754944e-38, %v748
    %v750 = vsel %vm747, %v749, %v745
    %v751 = vmul.f32 1.0, %v750
    %v752 = vtanh.pop %v712
    %v753 = vxor.u32 %v713, 2147483648
    %v754 = vmul.f32 %v753, 1.442695
    %v755 = vpow.pop %v754
    %v756 = vadd.f32 %v755, 1.0
    %v757 = vrcp.pop %v756
    %v758 = vmul.f32 %v756, %v757
    %v759 = vsub.f32 1.0, %v758
    %v760 = vmul.f32 %v757, %v759
    %v761 = vadd.f32 %v757, %v760
    %vm762 = vweird.f32 %v756
    %vm763 = vweird.f32 %v757
    %vm764 = vmor %vm762, %vm763
    %v765 = vsel %vm764, %v757, %v761
    %v766 = vand.u32 2147483647, %v756
    %vm767 = vcmp.eq.f32.partialorder %v766, 8.507059e+37
    %v768 = vand.u32 %v756, 2147483648
    %v769 = vor.u32 1.1754944e-38, %v768
    %v770 = vsel %vm767, %v769, %v765
    %v771 = vmul.f32 1.0, %v770
    %v772 = vmul.f32 %v751, %v622
    %v773 = vmul.f32 %v732, %v752
    %v774 = vadd.f32 %v772, %v773
    %v775 = vtanh.pop %v774
    %v776 = vmul.f32 %v771, %v775
    %777 = vst [vmem:[#allocation3] sm:$0xff] %v774
    %778 = vst [vmem:[#allocation2] sm:$0xff] %v776
    %s779 = scalar_lea.vmem [#allocation16], 8
    %780 = vst [vmem:[%s779] sm:$0xff] %v776
    %v781 = vld [vmem:[#allocation2] sm:$0xff]
    %v782 = vld [vmem:[#allocation3] sm:$0xff]
    %s783 = smul.u32 2, 4
    %s784 = smul.addr %s783, 8
    %s785 = scalar_lea.vmem [#allocation4], %s784
    %v786 = vld [vmem:[%s785] sm:$0xff]
    %v787 = vld [vmem:[%s785 + $0x8] sm:$0xff]
    %v788 = vld [vmem:[%s785 + $0x10] sm:$0xff]
    %v789 = vld [vmem:[%s785 + $0x18] sm:$0xff]
    %790 = vmatpush.msra.mxu0 %v458
    %791 = vmatpush.msra.mxu0 %v454
    %792 = vmatpush.msra.mxu0 %v450
    %793 = vmatpush.msra.mxu0 %v446
    %794 = vmatpush.msra.mxu0 %v442
    %795 = vmatpush.msra.mxu0 %v438
    %796 = vmatpush.msra.mxu0 %v434
    %797 = vmatpush.msra.mxu0 %v430
    %798 = vmatpush.msra.mxu0 %v426
    %799 = vmatpush.msra.mxu0 %v422
    %800 = vmatpush.msra.mxu0 %v418
    %801 = vmatpush.msra.mxu0 %v414
    %802 = vmatpush.msra.mxu0 %v410
    %803 = vmatpush.msra.mxu0 %v406
    %804 = vmatpush.msra.mxu0 %v402
    %805 = vmatpush.msra.mxu0 %v398
    %806 = vmatmul.f32.gmra.mxu0 %v781
    %v807 = vpop.f32.mrf.mxu0
    %v808 = vadd.f32 0.0, %v807
    %809 = vdwg.mxu0
    %810 = vmatpush.msra.mxu0 %v459
    %811 = vmatpush.msra.mxu0 %v455
    %812 = vmatpush.msra.mxu0 %v451
    %813 = vmatpush.msra.mxu0 %v447
    %814 = vmatpush.msra.mxu0 %v443
    %815 = vmatpush.msra.mxu0 %v439
    %816 = vmatpush.msra.mxu0 %v435
    %817 = vmatpush.msra.mxu0 %v431
    %818 = vmatpush.msra.mxu0 %v427
    %819 = vmatpush.msra.mxu0 %v423
    %820 = vmatpush.msra.mxu0 %v419
    %821 = vmatpush.msra.mxu0 %v415
    %822 = vmatpush.msra.mxu0 %v411
    %823 = vmatpush.msra.mxu0 %v407
    %824 = vmatpush.msra.mxu0 %v403
    %825 = vmatpush.msra.mxu0 %v399
    %826 = vmatmul.f32.gmra.mxu0 %v781
    %v827 = vpop.f32.mrf.mxu0
    %v828 = vadd.f32 0.0, %v827
    %829 = vdwg.mxu0
    %830 = vmatpush.msra.mxu0 %v460
    %831 = vmatpush.msra.mxu0 %v456
    %832 = vmatpush.msra.mxu0 %v452
    %833 = vmatpush.msra.mxu0 %v448
    %834 = vmatpush.msra.mxu0 %v444
    %835 = vmatpush.msra.mxu0 %v440
    %836 = vmatpush.msra.mxu0 %v436
    %837 = vmatpush.msra.mxu0 %v432
    %838 = vmatpush.msra.mxu0 %v428
    %839 = vmatpush.msra.mxu0 %v424
    %840 = vmatpush.msra.mxu0 %v420
    %841 = vmatpush.msra.mxu0 %v416
    %842 = vmatpush.msra.mxu0 %v412
    %843 = vmatpush.msra.mxu0 %v408
    %844 = vmatpush.msra.mxu0 %v404
    %845 = vmatpush.msra.mxu0 %v400
    %846 = vmatmul.f32.gmra.mxu0 %v781
    %v847 = vpop.f32.mrf.mxu0
    %v848 = vadd.f32 0.0, %v847
    %849 = vdwg.mxu0
    %850 = vmatpush.msra.mxu0 %v461
    %851 = vmatpush.msra.mxu0 %v457
    %852 = vmatpush.msra.mxu0 %v453
    %853 = vmatpush.msra.mxu0 %v449
    %854 = vmatpush.msra.mxu0 %v445
    %855 = vmatpush.msra.mxu0 %v441
    %856 = vmatpush.msra.mxu0 %v437
    %857 = vmatpush.msra.mxu0 %v433
    %858 = vmatpush.msra.mxu0 %v429
    %859 = vmatpush.msra.mxu0 %v425
    %860 = vmatpush.msra.mxu0 %v421
    %861 = vmatpush.msra.mxu0 %v417
    %862 = vmatpush.msra.mxu0 %v413
    %863 = vmatpush.msra.mxu0 %v409
    %864 = vmatpush.msra.mxu0 %v405
    %865 = vmatpush.msra.mxu0 %v401
    %866 = vmatmul.f32.gmra.mxu0 %v781
    %v867 = vpop.f32.mrf.mxu0
    %v868 = vadd.f32 0.0, %v867
    %869 = vdwg.mxu0
    %v870 = vadd.f32 %v786, %v808
    %v871 = vadd.f32 %v787, %v828
    %v872 = vadd.f32 %v788, %v848
    %v873 = vadd.f32 %v789, %v868
    %v874 = vxor.u32 %v870, 2147483648
    %v875 = vmul.f32 %v874, 1.442695
    %v876 = vpow.pop %v875
    %v877 = vadd.f32 %v876, 1.0
    %v878 = vrcp.pop %v877
    %v879 = vmul.f32 %v877, %v878
    %v880 = vsub.f32 1.0, %v879
    %v881 = vmul.f32 %v878, %v880
    %v882 = vadd.f32 %v878, %v881
    %vm883 = vweird.f32 %v877
    %vm884 = vweird.f32 %v878
    %vm885 = vmor %vm883, %vm884
    %v886 = vsel %vm885, %v878, %v882
    %v887 = vand.u32 2147483647, %v877
    %vm888 = vcmp.eq.f32.partialorder %v887, 8.507059e+37
    %v889 = vand.u32 %v877, 2147483648
    %v890 = vor.u32 1.1754944e-38, %v889
    %v891 = vsel %vm888, %v890, %v886
    %v892 = vmul.f32 1.0, %v891
    %v893 = vxor.u32 %v871, 2147483648
    %v894 = vmul.f32 %v893, 1.442695
    %v895 = vpow.pop %v894
    %v896 = vadd.f32 %v895, 1.0
    %v897 = vrcp.pop %v896
    %v898 = vmul.f32 %v896, %v897
    %v899 = vsub.f32 1.0, %v898
    %v900 = vmul.f32 %v897, %v899
    %v901 = vadd.f32 %v897, %v900
    %vm902 = vweird.f32 %v896
    %vm903 = vweird.f32 %v897
    %vm904 = vmor %vm902, %vm903
    %v905 = vsel %vm904, %v897, %v901
    %v906 = vand.u32 2147483647, %v896
    %vm907 = vcmp.eq.f32.partialorder %v906, 8.507059e+37
    %v908 = vand.u32 %v896, 2147483648
    %v909 = vor.u32 1.1754944e-38, %v908
    %v910 = vsel %vm907, %v909, %v905
    %v911 = vmul.f32 1.0, %v910
    %v912 = vtanh.pop %v872
    %v913 = vxor.u32 %v873, 2147483648
    %v914 = vmul.f32 %v913, 1.442695
    %v915 = vpow.pop %v914
    %v916 = vadd.f32 %v915, 1.0
    %v917 = vrcp.pop %v916
    %v918 = vmul.f32 %v916, %v917
    %v919 = vsub.f32 1.0, %v918
    %v920 = vmul.f32 %v917, %v919
    %v921 = vadd.f32 %v917, %v920
    %vm922 = vweird.f32 %v916
    %vm923 = vweird.f32 %v917
    %vm924 = vmor %vm922, %vm923
    %v925 = vsel %vm924, %v917, %v921
    %v926 = vand.u32 2147483647, %v916
    %vm927 = vcmp.eq.f32.partialorder %v926, 8.507059e+37
    %v928 = vand.u32 %v916, 2147483648
    %v929 = vor.u32 1.1754944e-38, %v928
    %v930 = vsel %vm927, %v929, %v925
    %v931 = vmul.f32 1.0, %v930
    %v932 = vmul.f32 %v911, %v782
    %v933 = vmul.f32 %v892, %v912
    %v934 = vadd.f32 %v932, %v933
    %v935 = vtanh.pop %v934
    %v936 = vmul.f32 %v931, %v935
    %937 = vst [vmem:[#allocation3] sm:$0xff] %v934
    %938 = vst [vmem:[#allocation2] sm:$0xff] %v936
    %s939 = scalar_lea.vmem [#allocation16], 16
    %940 = vst [vmem:[%s939] sm:$0xff] %v936
    %v941 = vld [vmem:[#allocation2] sm:$0xff]
    %v942 = vld [vmem:[#allocation3] sm:$0xff]
    %s943 = smul.u32 3, 4
    %s944 = smul.addr %s943, 8
    %s945 = scalar_lea.vmem [#allocation4], %s944
    %v946 = vld [vmem:[%s945] sm:$0xff]
    %v947 = vld [vmem:[%s945 + $0x8] sm:$0xff]
    %v948 = vld [vmem:[%s945 + $0x10] sm:$0xff]
    %v949 = vld [vmem:[%s945 + $0x18] sm:$0xff]
    %950 = vmatpush.msra.mxu0 %v458
    %951 = vmatpush.msra.mxu0 %v454
    %952 = vmatpush.msra.mxu0 %v450
    %953 = vmatpush.msra.mxu0 %v446
    %954 = vmatpush.msra.mxu0 %v442
    %955 = vmatpush.msra.mxu0 %v438
    %956 = vmatpush.msra.mxu0 %v434
    %957 = vmatpush.msra.mxu0 %v430
    %958 = vmatpush.msra.mxu0 %v426
    %959 = vmatpush.msra.mxu0 %v422
    %960 = vmatpush.msra.mxu0 %v418
    %961 = vmatpush.msra.mxu0 %v414
    %962 = vmatpush.msra.mxu0 %v410
    %963 = vmatpush.msra.mxu0 %v406
    %964 = vmatpush.msra.mxu0 %v402
    %965 = vmatpush.msra.mxu0 %v398
    %966 = vmatmul.f32.gmra.mxu0 %v941
    %v967 = vpop.f32.mrf.mxu0
    %v968 = vadd.f32 0.0, %v967
    %969 = vdwg.mxu0
    %970 = vmatpush.msra.mxu0 %v459
    %971 = vmatpush.msra.mxu0 %v455
    %972 = vmatpush.msra.mxu0 %v451
    %973 = vmatpush.msra.mxu0 %v447
    %974 = vmatpush.msra.mxu0 %v443
    %975 = vmatpush.msra.mxu0 %v439
    %976 = vmatpush.msra.mxu0 %v435
    %977 = vmatpush.msra.mxu0 %v431
    %978 = vmatpush.msra.mxu0 %v427
    %979 = vmatpush.msra.mxu0 %v423
    %980 = vmatpush.msra.mxu0 %v419
    %981 = vmatpush.msra.mxu0 %v415
    %982 = vmatpush.msra.mxu0 %v411
    %983 = vmatpush.msra.mxu0 %v407
    %984 = vmatpush.msra.mxu0 %v403
    %985 = vmatpush.msra.mxu0 %v399
    %986 = vmatmul.f32.gmra.mxu0 %v941
    %v987 = vpop.f32.mrf.mxu0
    %v988 = vadd.f32 0.0, %v987
    %989 = vdwg.mxu0
    %990 = vmatpush.msra.mxu0 %v460
    %991 = vmatpush.msra.mxu0 %v456
    %992 = vmatpush.msra.mxu0 %v452
    %993 = vmatpush.msra.mxu0 %v448
    %994 = vmatpush.msra.mxu0 %v444
    %995 = vmatpush.msra.mxu0 %v440
    %996 = vmatpush.msra.mxu0 %v436
    %997 = vmatpush.msra.mxu0 %v432
    %998 = vmatpush.msra.mxu0 %v428
    %999 = vmatpush.msra.mxu0 %v424
    %1000 = vmatpush.msra.mxu0 %v420
    %1001 = vmatpush.msra.mxu0 %v416
    %1002 = vmatpush.msra.mxu0 %v412
    %1003 = vmatpush.msra.mxu0 %v408
    %1004 = vmatpush.msra.mxu0 %v404
    %1005 = vmatpush.msra.mxu0 %v400
    %1006 = vmatmul.f32.gmra.mxu0 %v941
    %v1007 = vpop.f32.mrf.mxu0
    %v1008 = vadd.f32 0.0, %v1007
    %1009 = vdwg.mxu0
    %1010 = vmatpush.msra.mxu0 %v461
    %1011 = vmatpush.msra.mxu0 %v457
    %1012 = vmatpush.msra.mxu0 %v453
    %1013 = vmatpush.msra.mxu0 %v449
    %1014 = vmatpush.msra.mxu0 %v445
    %1015 = vmatpush.msra.mxu0 %v441
    %1016 = vmatpush.msra.mxu0 %v437
    %1017 = vmatpush.msra.mxu0 %v433
    %1018 = vmatpush.msra.mxu0 %v429
    %1019 = vmatpush.msra.mxu0 %v425
    %1020 = vmatpush.msra.mxu0 %v421
    %1021 = vmatpush.msra.mxu0 %v417
    %1022 = vmatpush.msra.mxu0 %v413
    %1023 = vmatpush.msra.mxu0 %v409
    %1024 = vmatpush.msra.mxu0 %v405
    %1025 = vmatpush.msra.mxu0 %v401
    %1026 = vmatmul.f32.gmra.mxu0 %v941
    %v1027 = vpop.f32.mrf.mxu0
    %v1028 = vadd.f32 0.0, %v1027
    %1029 = vdwg.mxu0
    %v1030 = vadd.f32 %v946, %v968
    %v1031 = vadd.f32 %v947, %v988
    %v1032 = vadd.f32 %v948, %v1008
    %v1033 = vadd.f32 %v949, %v1028
    %v1034 = vxor.u32 %v1030, 2147483648
    %v1035 = vmul.f32 %v1034, 1.442695
    %v1036 = vpow.pop %v1035
    %v1037 = vadd.f32 %v1036, 1.0
    %v1038 = vrcp.pop %v1037
    %v1039 = vmul.f32 %v1037, %v1038
    %v1040 = vsub.f32 1.0, %v1039
    %v1041 = vmul.f32 %v1038, %v1040
    %v1042 = vadd.f32 %v1038, %v1041
    %vm1043 = vweird.f32 %v1037
    %vm1044 = vweird.f32 %v1038
    %vm1045 = vmor %vm1043, %vm1044
    %v1046 = vsel %vm1045, %v1038, %v1042
    %v1047 = vand.u32 2147483647, %v1037
    %vm1048 = vcmp.eq.f32.partialorder %v1047, 8.507059e+37
    %v1049 = vand.u32 %v1037, 2147483648
    %v1050 = vor.u32 1.1754944e-38, %v1049
    %v1051 = vsel %vm1048, %v1050, %v1046
    %v1052 = vmul.f32 1.0, %v1051
    %v1053 = vxor.u32 %v1031, 2147483648
    %v1054 = vmul.f32 %v1053, 1.442695
    %v1055 = vpow.pop %v1054
    %v1056 = vadd.f32 %v1055, 1.0
    %v1057 = vrcp.pop %v1056
    %v1058 = vmul.f32 %v1056, %v1057
    %v1059 = vsub.f32 1.0, %v1058
    %v1060 = vmul.f32 %v1057, %v1059
    %v1061 = vadd.f32 %v1057, %v1060
    %vm1062 = vweird.f32 %v1056
    %vm1063 = vweird.f32 %v1057
    %vm1064 = vmor %vm1062, %vm1063
    %v1065 = vsel %vm1064, %v1057, %v1061
    %v1066 = vand.u32 2147483647, %v1056
    %vm1067 = vcmp.eq.f32.partialorder %v1066, 8.507059e+37
    %v1068 = vand.u32 %v1056, 2147483648
    %v1069 = vor.u32 1.1754944e-38, %v1068
    %v1070 = vsel %vm1067, %v1069, %v1065
    %v1071 = vmul.f32 1.0, %v1070
    %v1072 = vtanh.pop %v1032
    %v1073 = vxor.u32 %v1033, 2147483648
    %v1074 = vmul.f32 %v1073, 1.442695
    %v1075 = vpow.pop %v1074
    %v1076 = vadd.f32 %v1075, 1.0
    %v1077 = vrcp.pop %v1076
    %v1078 = vmul.f32 %v1076, %v1077
    %v1079 = vsub.f32 1.0, %v1078
    %v1080 = vmul.f32 %v1077, %v1079
    %v1081 = vadd.f32 %v1077, %v1080
    %vm1082 = vweird.f32 %v1076
    %vm1083 = vweird.f32 %v1077
    %vm1084 = vmor %vm1082, %vm1083
    %v1085 = vsel %vm1084, %v1077, %v1081
    %v1086 = vand.u32 2147483647, %v1076
    %vm1087 = vcmp.eq.f32.partialorder %v1086, 8.507059e+37
    %v1088 = vand.u32 %v1076, 2147483648
    %v1089 = vor.u32 1.1754944e-38, %v1088
    %v1090 = vsel %vm1087, %v1089, %v1085
    %v1091 = vmul.f32 1.0, %v1090
    %v1092 = vmul.f32 %v1071, %v942
    %v1093 = vmul.f32 %v1052, %v1072
    %v1094 = vadd.f32 %v1092, %v1093
    %v1095 = vtanh.pop %v1094
    %v1096 = vmul.f32 %v1091, %v1095
    %1097 = vst [vmem:[#allocation3] sm:$0xff] %v1094
    %1098 = vst [vmem:[#allocation2] sm:$0xff] %v1096
    %s1099 = scalar_lea.vmem [#allocation16], 24
    %1100 = vst [vmem:[%s1099] sm:$0xff] %v1096
    %v1101 = vld [vmem:[#allocation2] sm:$0xff]
    %v1102 = vld [vmem:[#allocation3] sm:$0xff]
    %s1103 = smul.u32 4, 4
    %s1104 = smul.addr %s1103, 8
    %s1105 = scalar_lea.vmem [#allocation4], %s1104
    %v1106 = vld [vmem:[%s1105] sm:$0xff]
    %v1107 = vld [vmem:[%s1105 + $0x8] sm:$0xff]
    %v1108 = vld [vmem:[%s1105 + $0x10] sm:$0xff]
    %v1109 = vld [vmem:[%s1105 + $0x18] sm:$0xff]
    %1110 = vmatpush.msra.mxu0 %v458
    %1111 = vmatpush.msra.mxu0 %v454
    %1112 = vmatpush.msra.mxu0 %v450
    %1113 = vmatpush.msra.mxu0 %v446
    %1114 = vmatpush.msra.mxu0 %v442
    %1115 = vmatpush.msra.mxu0 %v438
    %1116 = vmatpush.msra.mxu0 %v434
    %1117 = vmatpush.msra.mxu0 %v430
    %1118 = vmatpush.msra.mxu0 %v426
    %1119 = vmatpush.msra.mxu0 %v422
    %1120 = vmatpush.msra.mxu0 %v418
    %1121 = vmatpush.msra.mxu0 %v414
    %1122 = vmatpush.msra.mxu0 %v410
    %1123 = vmatpush.msra.mxu0 %v406
    %1124 = vmatpush.msra.mxu0 %v402
    %1125 = vmatpush.msra.mxu0 %v398
    %1126 = vmatmul.f32.gmra.mxu0 %v1101
    %v1127 = vpop.f32.mrf.mxu0
    %v1128 = vadd.f32 0.0, %v1127
    %1129 = vdwg.mxu0
    %1130 = vmatpush.msra.mxu0 %v459
    %1131 = vmatpush.msra.mxu0 %v455
    %1132 = vmatpush.msra.mxu0 %v451
    %1133 = vmatpush.msra.mxu0 %v447
    %1134 = vmatpush.msra.mxu0 %v443
    %1135 = vmatpush.msra.mxu0 %v439
    %1136 = vmatpush.msra.mxu0 %v435
    %1137 = vmatpush.msra.mxu0 %v431
    %1138 = vmatpush.msra.mxu0 %v427
    %1139 = vmatpush.msra.mxu0 %v423
    %1140 = vmatpush.msra.mxu0 %v419
    %1141 = vmatpush.msra.mxu0 %v415
    %1142 = vmatpush.msra.mxu0 %v411
    %1143 = vmatpush.msra.mxu0 %v407
    %1144 = vmatpush.msra.mxu0 %v403
    %1145 = vmatpush.msra.mxu0 %v399
    %1146 = vmatmul.f32.gmra.mxu0 %v1101
    %v1147 = vpop.f32.mrf.mxu0
    %v1148 = vadd.f32 0.0, %v1147
    %1149 = vdwg.mxu0
    %1150 = vmatpush.msra.mxu0 %v460
    %1151 = vmatpush.msra.mxu0 %v456
    %1152 = vmatpush.msra.mxu0 %v452
    %1153 = vmatpush.msra.mxu0 %v448
    %1154 = vmatpush.msra.mxu0 %v444
    %1155 = vmatpush.msra.mxu0 %v440
    %1156 = vmatpush.msra.mxu0 %v436
    %1157 = vmatpush.msra.mxu0 %v432
    %1158 = vmatpush.msra.mxu0 %v428
    %1159 = vmatpush.msra.mxu0 %v424
    %1160 = vmatpush.msra.mxu0 %v420
    %1161 = vmatpush.msra.mxu0 %v416
    %1162 = vmatpush.msra.mxu0 %v412
    %1163 = vmatpush.msra.mxu0 %v408
    %1164 = vmatpush.msra.mxu0 %v404
    %1165 = vmatpush.msra.mxu0 %v400
    %1166 = vmatmul.f32.gmra.mxu0 %v1101
    %v1167 = vpop.f32.mrf.mxu0
    %v1168 = vadd.f32 0.0, %v1167
    %1169 = vdwg.mxu0
    %1170 = vmatpush.msra.mxu0 %v461
    %1171 = vmatpush.msra.mxu0 %v457
    %1172 = vmatpush.msra.mxu0 %v453
    %1173 = vmatpush.msra.mxu0 %v449
    %1174 = vmatpush.msra.mxu0 %v445
    %1175 = vmatpush.msra.mxu0 %v441
    %1176 = vmatpush.msra.mxu0 %v437
    %1177 = vmatpush.msra.mxu0 %v433
    %1178 = vmatpush.msra.mxu0 %v429
    %1179 = vmatpush.msra.mxu0 %v425
    %1180 = vmatpush.msra.mxu0 %v421
    %1181 = vmatpush.msra.mxu0 %v417
    %1182 = vmatpush.msra.mxu0 %v413
    %1183 = vmatpush.msra.mxu0 %v409
    %1184 = vmatpush.msra.mxu0 %v405
    %1185 = vmatpush.msra.mxu0 %v401
    %1186 = vmatmul.f32.gmra.mxu0 %v1101
    %v1187 = vpop.f32.mrf.mxu0
    %v1188 = vadd.f32 0.0, %v1187
    %1189 = vdwg.mxu0
    %v1190 = vadd.f32 %v1106, %v1128
    %v1191 = vadd.f32 %v1107, %v1148
    %v1192 = vadd.f32 %v1108, %v1168
    %v1193 = vadd.f32 %v1109, %v1188
    %v1194 = vxor.u32 %v1190, 2147483648
    %v1195 = vmul.f32 %v1194, 1.442695
    %v1196 = vpow.pop %v1195
    %v1197 = vadd.f32 %v1196, 1.0
    %v1198 = vrcp.pop %v1197
    %v1199 = vmul.f32 %v1197, %v1198
    %v1200 = vsub.f32 1.0, %v1199
    %v1201 = vmul.f32 %v1198, %v1200
    %v1202 = vadd.f32 %v1198, %v1201
    %vm1203 = vweird.f32 %v1197
    %vm1204 = vweird.f32 %v1198
    %vm1205 = vmor %vm1203, %vm1204
    %v1206 = vsel %vm1205, %v1198, %v1202
    %v1207 = vand.u32 2147483647, %v1197
    %vm1208 = vcmp.eq.f32.partialorder %v1207, 8.507059e+37
    %v1209 = vand.u32 %v1197, 2147483648
    %v1210 = vor.u32 1.1754944e-38, %v1209
    %v1211 = vsel %vm1208, %v1210, %v1206
    %v1212 = vmul.f32 1.0, %v1211
    %v1213 = vxor.u32 %v1191, 2147483648
    %v1214 = vmul.f32 %v1213, 1.442695
    %v1215 = vpow.pop %v1214
    %v1216 = vadd.f32 %v1215, 1.0
    %v1217 = vrcp.pop %v1216
    %v1218 = vmul.f32 %v1216, %v1217
    %v1219 = vsub.f32 1.0, %v1218
    %v1220 = vmul.f32 %v1217, %v1219
    %v1221 = vadd.f32 %v1217, %v1220
    %vm1222 = vweird.f32 %v1216
    %vm1223 = vweird.f32 %v1217
    %vm1224 = vmor %vm1222, %vm1223
    %v1225 = vsel %vm1224, %v1217, %v1221
    %v1226 = vand.u32 2147483647, %v1216
    %vm1227 = vcmp.eq.f32.partialorder %v1226, 8.507059e+37
    %v1228 = vand.u32 %v1216, 2147483648
    %v1229 = vor.u32 1.1754944e-38, %v1228
    %v1230 = vsel %vm1227, %v1229, %v1225
    %v1231 = vmul.f32 1.0, %v1230
    %v1232 = vtanh.pop %v1192
    %v1233 = vxor.u32 %v1193, 2147483648
    %v1234 = vmul.f32 %v1233, 1.442695
    %v1235 = vpow.pop %v1234
    %v1236 = vadd.f32 %v1235, 1.0
    %v1237 = vrcp.pop %v1236
    %v1238 = vmul.f32 %v1236, %v1237
    %v1239 = vsub.f32 1.0, %v1238
    %v1240 = vmul.f32 %v1237, %v1239
    %v1241 = vadd.f32 %v1237, %v1240
    %vm1242 = vweird.f32 %v1236
    %vm1243 = vweird.f32 %v1237
    %vm1244 = vmor %vm1242, %vm1243
    %v1245 = vsel %vm1244, %v1237, %v1241
    %v1246 = vand.u32 2147483647, %v1236
    %vm1247 = vcmp.eq.f32.partialorder %v1246, 8.507059e+37
    %v1248 = vand.u32 %v1236, 2147483648
    %v1249 = vor.u32 1.1754944e-38, %v1248
    %v1250 = vsel %vm1247, %v1249, %v1245
    %v1251 = vmul.f32 1.0, %v1250
    %v1252 = vmul.f32 %v1231, %v1102
    %v1253 = vmul.f32 %v1212, %v1232
    %v1254 = vadd.f32 %v1252, %v1253
    %v1255 = vtanh.pop %v1254
    %v1256 = vmul.f32 %v1251, %v1255
    %1257 = vst [vmem:[#allocation3] sm:$0xff] %v1254
    %1258 = vst [vmem:[#allocation2] sm:$0xff] %v1256
    %s1259 = scalar_lea.vmem [#allocation16], 32
    %1260 = vst [vmem:[%s1259] sm:$0xff] %v1256
    %v1261 = vld [vmem:[#allocation2] sm:$0xff]
    %v1262 = vld [vmem:[#allocation3] sm:$0xff]
    %s1263 = smul.u32 5, 4
    %s1264 = smul.addr %s1263, 8
    %s1265 = scalar_lea.vmem [#allocation4], %s1264
    %v1266 = vld [vmem:[%s1265] sm:$0xff]
    %v1267 = vld [vmem:[%s1265 + $0x8] sm:$0xff]
    %v1268 = vld [vmem:[%s1265 + $0x10] sm:$0xff]
    %v1269 = vld [vmem:[%s1265 + $0x18] sm:$0xff]
    %1270 = vmatpush.msra.mxu0 %v458
    %1271 = vmatpush.msra.mxu0 %v454
    %1272 = vmatpush.msra.mxu0 %v450
    %1273 = vmatpush.msra.mxu0 %v446
    %1274 = vmatpush.msra.mxu0 %v442
    %1275 = vmatpush.msra.mxu0 %v438
    %1276 = vmatpush.msra.mxu0 %v434
    %1277 = vmatpush.msra.mxu0 %v430
    %1278 = vmatpush.msra.mxu0 %v426
    %1279 = vmatpush.msra.mxu0 %v422
    %1280 = vmatpush.msra.mxu0 %v418
    %1281 = vmatpush.msra.mxu0 %v414
    %1282 = vmatpush.msra.mxu0 %v410
    %1283 = vmatpush.msra.mxu0 %v406
    %1284 = vmatpush.msra.mxu0 %v402
    %1285 = vmatpush.msra.mxu0 %v398
    %1286 = vmatmul.f32.gmra.mxu0 %v1261
    %v1287 = vpop.f32.mrf.mxu0
    %v1288 = vadd.f32 0.0, %v1287
    %1289 = vdwg.mxu0
    %1290 = vmatpush.msra.mxu0 %v459
    %1291 = vmatpush.msra.mxu0 %v455
    %1292 = vmatpush.msra.mxu0 %v451
    %1293 = vmatpush.msra.mxu0 %v447
    %1294 = vmatpush.msra.mxu0 %v443
    %1295 = vmatpush.msra.mxu0 %v439
    %1296 = vmatpush.msra.mxu0 %v435
    %1297 = vmatpush.msra.mxu0 %v431
    %1298 = vmatpush.msra.mxu0 %v427
    %1299 = vmatpush.msra.mxu0 %v423
    %1300 = vmatpush.msra.mxu0 %v419
    %1301 = vmatpush.msra.mxu0 %v415
    %1302 = vmatpush.msra.mxu0 %v411
    %1303 = vmatpush.msra.mxu0 %v407
    %1304 = vmatpush.msra.mxu0 %v403
    %1305 = vmatpush.msra.mxu0 %v399
    %1306 = vmatmul.f32.gmra.mxu0 %v1261
    %v1307 = vpop.f32.mrf.mxu0
    %v1308 = vadd.f32 0.0, %v1307
    %1309 = vdwg.mxu0
    %1310 = vmatpush.msra.mxu0 %v460
    %1311 = vmatpush.msra.mxu0 %v456
    %1312 = vmatpush.msra.mxu0 %v452
    %1313 = vmatpush.msra.mxu0 %v448
    %1314 = vmatpush.msra.mxu0 %v444
    %1315 = vmatpush.msra.mxu0 %v440
    %1316 = vmatpush.msra.mxu0 %v436
    %1317 = vmatpush.msra.mxu0 %v432
    %1318 = vmatpush.msra.mxu0 %v428
    %1319 = vmatpush.msra.mxu0 %v424
    %1320 = vmatpush.msra.mxu0 %v420
    %1321 = vmatpush.msra.mxu0 %v416
    %1322 = vmatpush.msra.mxu0 %v412
    %1323 = vmatpush.msra.mxu0 %v408
    %1324 = vmatpush.msra.mxu0 %v404
    %1325 = vmatpush.msra.mxu0 %v400
    %1326 = vmatmul.f32.gmra.mxu0 %v1261
    %v1327 = vpop.f32.mrf.mxu0
    %v1328 = vadd.f32 0.0, %v1327
    %1329 = vdwg.mxu0
    %1330 = vmatpush.msra.mxu0 %v461
    %1331 = vmatpush.msra.mxu0 %v457
    %1332 = vmatpush.msra.mxu0 %v453
    %1333 = vmatpush.msra.mxu0 %v449
    %1334 = vmatpush.msra.mxu0 %v445
    %1335 = vmatpush.msra.mxu0 %v441
    %1336 = vmatpush.msra.mxu0 %v437
    %1337 = vmatpush.msra.mxu0 %v433
    %1338 = vmatpush.msra.mxu0 %v429
    %1339 = vmatpush.msra.mxu0 %v425
    %1340 = vmatpush.msra.mxu0 %v421
    %1341 = vmatpush.msra.mxu0 %v417
    %1342 = vmatpush.msra.mxu0 %v413
    %1343 = vmatpush.msra.mxu0 %v409
    %1344 = vmatpush.msra.mxu0 %v405
    %1345 = vmatpush.msra.mxu0 %v401
    %1346 = vmatmul.f32.gmra.mxu0 %v1261
    %v1347 = vpop.f32.mrf.mxu0
    %v1348 = vadd.f32 0.0, %v1347
    %1349 = vdwg.mxu0
    %v1350 = vadd.f32 %v1266, %v1288
    %v1351 = vadd.f32 %v1267, %v1308
    %v1352 = vadd.f32 %v1268, %v1328
    %v1353 = vadd.f32 %v1269, %v1348
    %v1354 = vxor.u32 %v1350, 2147483648
    %v1355 = vmul.f32 %v1354, 1.442695
    %v1356 = vpow.pop %v1355
    %v1357 = vadd.f32 %v1356, 1.0
    %v1358 = vrcp.pop %v1357
    %v1359 = vmul.f32 %v1357, %v1358
    %v1360 = vsub.f32 1.0, %v1359
    %v1361 = vmul.f32 %v1358, %v1360
    %v1362 = vadd.f32 %v1358, %v1361
    %vm1363 = vweird.f32 %v1357
    %vm1364 = vweird.f32 %v1358
    %vm1365 = vmor %vm1363, %vm1364
    %v1366 = vsel %vm1365, %v1358, %v1362
    %v1367 = vand.u32 2147483647, %v1357
    %vm1368 = vcmp.eq.f32.partialorder %v1367, 8.507059e+37
    %v1369 = vand.u32 %v1357, 2147483648
    %v1370 = vor.u32 1.1754944e-38, %v1369
    %v1371 = vsel %vm1368, %v1370, %v1366
    %v1372 = vmul.f32 1.0, %v1371
    %v1373 = vxor.u32 %v1351, 2147483648
    %v1374 = vmul.f32 %v1373, 1.442695
    %v1375 = vpow.pop %v1374
    %v1376 = vadd.f32 %v1375, 1.0
    %v1377 = vrcp.pop %v1376
    %v1378 = vmul.f32 %v1376, %v1377
    %v1379 = vsub.f32 1.0, %v1378
    %v1380 = vmul.f32 %v1377, %v1379
    %v1381 = vadd.f32 %v1377, %v1380
    %vm1382 = vweird.f32 %v1376
    %vm1383 = vweird.f32 %v1377
    %vm1384 = vmor %vm1382, %vm1383
    %v1385 = vsel %vm1384, %v1377, %v1381
    %v1386 = vand.u32 2147483647, %v1376
    %vm1387 = vcmp.eq.f32.partialorder %v1386, 8.507059e+37
    %v1388 = vand.u32 %v1376, 2147483648
    %v1389 = vor.u32 1.1754944e-38, %v1388
    %v1390 = vsel %vm1387, %v1389, %v1385
    %v1391 = vmul.f32 1.0, %v1390
    %v1392 = vtanh.pop %v1352
    %v1393 = vxor.u32 %v1353, 2147483648
    %v1394 = vmul.f32 %v1393, 1.442695
    %v1395 = vpow.pop %v1394
    %v1396 = vadd.f32 %v1395, 1.0
    %v1397 = vrcp.pop %v1396
    %v1398 = vmul.f32 %v1396, %v1397
    %v1399 = vsub.f32 1.0, %v1398
    %v1400 = vmul.f32 %v1397, %v1399
    %v1401 = vadd.f32 %v1397, %v1400
    %vm1402 = vweird.f32 %v1396
    %vm1403 = vweird.f32 %v1397
    %vm1404 = vmor %vm1402, %vm1403
    %v1405 = vsel %vm1404, %v1397, %v1401
    %v1406 = vand.u32 2147483647, %v1396
    %vm1407 = vcmp.eq.f32.partialorder %v1406, 8.507059e+37
    %v1408 = vand.u32 %v1396, 2147483648
    %v1409 = vor.u32 1.1754944e-38, %v1408
    %v1410 = vsel %vm1407, %v1409, %v1405
    %v1411 = vmul.f32 1.0, %v1410
    %v1412 = vmul.f32 %v1391, %v1262
    %v1413 = vmul.f32 %v1372, %v1392
    %v1414 = vadd.f32 %v1412, %v1413
    %v1415 = vtanh.pop %v1414
    %v1416 = vmul.f32 %v1411, %v1415
    %1417 = vst [vmem:[#allocation3] sm:$0xff] %v1414
    %1418 = vst [vmem:[#allocation2] sm:$0xff] %v1416
    %s1419 = scalar_lea.vmem [#allocation16], 40
    %1420 = vst [vmem:[%s1419] sm:$0xff] %v1416
    %v1421 = vld [vmem:[#allocation2] sm:$0xff]
    %v1422 = vld [vmem:[#allocation3] sm:$0xff]
    %s1423 = smul.u32 6, 4
    %s1424 = smul.addr %s1423, 8
    %s1425 = scalar_lea.vmem [#allocation4], %s1424
    %v1426 = vld [vmem:[%s1425] sm:$0xff]
    %v1427 = vld [vmem:[%s1425 + $0x8] sm:$0xff]
    %v1428 = vld [vmem:[%s1425 + $0x10] sm:$0xff]
    %v1429 = vld [vmem:[%s1425 + $0x18] sm:$0xff]
    %1430 = vmatpush.msra.mxu0 %v458
    %1431 = vmatpush.msra.mxu0 %v454
    %1432 = vmatpush.msra.mxu0 %v450
    %1433 = vmatpush.msra.mxu0 %v446
    %1434 = vmatpush.msra.mxu0 %v442
    %1435 = vmatpush.msra.mxu0 %v438
    %1436 = vmatpush.msra.mxu0 %v434
    %1437 = vmatpush.msra.mxu0 %v430
    %1438 = vmatpush.msra.mxu0 %v426
    %1439 = vmatpush.msra.mxu0 %v422
    %1440 = vmatpush.msra.mxu0 %v418
    %1441 = vmatpush.msra.mxu0 %v414
    %1442 = vmatpush.msra.mxu0 %v410
    %1443 = vmatpush.msra.mxu0 %v406
    %1444 = vmatpush.msra.mxu0 %v402
    %1445 = vmatpush.msra.mxu0 %v398
    %1446 = vmatmul.f32.gmra.mxu0 %v1421
    %v1447 = vpop.f32.mrf.mxu0
    %v1448 = vadd.f32 0.0, %v1447
    %1449 = vdwg.mxu0
    %1450 = vmatpush.msra.mxu0 %v459
    %1451 = vmatpush.msra.mxu0 %v455
    %1452 = vmatpush.msra.mxu0 %v451
    %1453 = vmatpush.msra.mxu0 %v447
    %1454 = vmatpush.msra.mxu0 %v443
    %1455 = vmatpush.msra.mxu0 %v439
    %1456 = vmatpush.msra.mxu0 %v435
    %1457 = vmatpush.msra.mxu0 %v431
    %1458 = vmatpush.msra.mxu0 %v427
    %1459 = vmatpush.msra.mxu0 %v423
    %1460 = vmatpush.msra.mxu0 %v419
    %1461 = vmatpush.msra.mxu0 %v415
    %1462 = vmatpush.msra.mxu0 %v411
    %1463 = vmatpush.msra.mxu0 %v407
    %1464 = vmatpush.msra.mxu0 %v403
    %1465 = vmatpush.msra.mxu0 %v399
    %1466 = vmatmul.f32.gmra.mxu0 %v1421
    %v1467 = vpop.f32.mrf.mxu0
    %v1468 = vadd.f32 0.0, %v1467
    %1469 = vdwg.mxu0
    %1470 = vmatpush.msra.mxu0 %v460
    %1471 = vmatpush.msra.mxu0 %v456
    %1472 = vmatpush.msra.mxu0 %v452
    %1473 = vmatpush.msra.mxu0 %v448
    %1474 = vmatpush.msra.mxu0 %v444
    %1475 = vmatpush.msra.mxu0 %v440
    %1476 = vmatpush.msra.mxu0 %v436
    %1477 = vmatpush.msra.mxu0 %v432
    %1478 = vmatpush.msra.mxu0 %v428
    %1479 = vmatpush.msra.mxu0 %v424
    %1480 = vmatpush.msra.mxu0 %v420
    %1481 = vmatpush.msra.mxu0 %v416
    %1482 = vmatpush.msra.mxu0 %v412
    %1483 = vmatpush.msra.mxu0 %v408
    %1484 = vmatpush.msra.mxu0 %v404
    %1485 = vmatpush.msra.mxu0 %v400
    %1486 = vmatmul.f32.gmra.mxu0 %v1421
    %v1487 = vpop.f32.mrf.mxu0
    %v1488 = vadd.f32 0.0, %v1487
    %1489 = vdwg.mxu0
    %1490 = vmatpush.msra.mxu0 %v461
    %1491 = vmatpush.msra.mxu0 %v457
    %1492 = vmatpush.msra.mxu0 %v453
    %1493 = vmatpush.msra.mxu0 %v449
    %1494 = vmatpush.msra.mxu0 %v445
    %1495 = vmatpush.msra.mxu0 %v441
    %1496 = vmatpush.msra.mxu0 %v437
    %1497 = vmatpush.msra.mxu0 %v433
    %1498 = vmatpush.msra.mxu0 %v429
    %1499 = vmatpush.msra.mxu0 %v425
    %1500 = vmatpush.msra.mxu0 %v421
    %1501 = vmatpush.msra.mxu0 %v417
    %1502 = vmatpush.msra.mxu0 %v413
    %1503 = vmatpush.msra.mxu0 %v409
    %1504 = vmatpush.msra.mxu0 %v405
    %1505 = vmatpush.msra.mxu0 %v401
    %1506 = vmatmul.f32.gmra.mxu0 %v1421
    %v1507 = vpop.f32.mrf.mxu0
    %v1508 = vadd.f32 0.0, %v1507
    %1509 = vdwg.mxu0
    %v1510 = vadd.f32 %v1426, %v1448
    %v1511 = vadd.f32 %v1427, %v1468
    %v1512 = vadd.f32 %v1428, %v1488
    %v1513 = vadd.f32 %v1429, %v1508
    %v1514 = vxor.u32 %v1510, 2147483648
    %v1515 = vmul.f32 %v1514, 1.442695
    %v1516 = vpow.pop %v1515
    %v1517 = vadd.f32 %v1516, 1.0
    %v1518 = vrcp.pop %v1517
    %v1519 = vmul.f32 %v1517, %v1518
    %v1520 = vsub.f32 1.0, %v1519
    %v1521 = vmul.f32 %v1518, %v1520
    %v1522 = vadd.f32 %v1518, %v1521
    %vm1523 = vweird.f32 %v1517
    %vm1524 = vweird.f32 %v1518
    %vm1525 = vmor %vm1523, %vm1524
    %v1526 = vsel %vm1525, %v1518, %v1522
    %v1527 = vand.u32 2147483647, %v1517
    %vm1528 = vcmp.eq.f32.partialorder %v1527, 8.507059e+37
    %v1529 = vand.u32 %v1517, 2147483648
    %v1530 = vor.u32 1.1754944e-38, %v1529
    %v1531 = vsel %vm1528, %v1530, %v1526
    %v1532 = vmul.f32 1.0, %v1531
    %v1533 = vxor.u32 %v1511, 2147483648
    %v1534 = vmul.f32 %v1533, 1.442695
    %v1535 = vpow.pop %v1534
    %v1536 = vadd.f32 %v1535, 1.0
    %v1537 = vrcp.pop %v1536
    %v1538 = vmul.f32 %v1536, %v1537
    %v1539 = vsub.f32 1.0, %v1538
    %v1540 = vmul.f32 %v1537, %v1539
    %v1541 = vadd.f32 %v1537, %v1540
    %vm1542 = vweird.f32 %v1536
    %vm1543 = vweird.f32 %v1537
    %vm1544 = vmor %vm1542, %vm1543
    %v1545 = vsel %vm1544, %v1537, %v1541
    %v1546 = vand.u32 2147483647, %v1536
    %vm1547 = vcmp.eq.f32.partialorder %v1546, 8.507059e+37
    %v1548 = vand.u32 %v1536, 2147483648
    %v1549 = vor.u32 1.1754944e-38, %v1548
    %v1550 = vsel %vm1547, %v1549, %v1545
    %v1551 = vmul.f32 1.0, %v1550
    %v1552 = vtanh.pop %v1512
    %v1553 = vxor.u32 %v1513, 2147483648
    %v1554 = vmul.f32 %v1553, 1.442695
    %v1555 = vpow.pop %v1554
    %v1556 = vadd.f32 %v1555, 1.0
    %v1557 = vrcp.pop %v1556
    %v1558 = vmul.f32 %v1556, %v1557
    %v1559 = vsub.f32 1.0, %v1558
    %v1560 = vmul.f32 %v1557, %v1559
    %v1561 = vadd.f32 %v1557, %v1560
    %vm1562 = vweird.f32 %v1556
    %vm1563 = vweird.f32 %v1557
    %vm1564 = vmor %vm1562, %vm1563
    %v1565 = vsel %vm1564, %v1557, %v1561
    %v1566 = vand.u32 2147483647, %v1556
    %vm1567 = vcmp.eq.f32.partialorder %v1566, 8.507059e+37
    %v1568 = vand.u32 %v1556, 2147483648
    %v1569 = vor.u32 1.1754944e-38, %v1568
    %v1570 = vsel %vm1567, %v1569, %v1565
    %v1571 = vmul.f32 1.0, %v1570
    %v1572 = vmul.f32 %v1551, %v1422
    %v1573 = vmul.f32 %v1532, %v1552
    %v1574 = vadd.f32 %v1572, %v1573
    %v1575 = vtanh.pop %v1574
    %v1576 = vmul.f32 %v1571, %v1575
    %1577 = vst [vmem:[#allocation3] sm:$0xff] %v1574
    %1578 = vst [vmem:[#allocation2] sm:$0xff] %v1576
    %s1579 = scalar_lea.vmem [#allocation16], 48
    %1580 = vst [vmem:[%s1579] sm:$0xff] %v1576
    %v1581 = vld [vmem:[#allocation2] sm:$0xff]
    %v1582 = vld [vmem:[#allocation3] sm:$0xff]
    %s1583 = smul.u32 7, 4
    %s1584 = smul.addr %s1583, 8
    %s1585 = scalar_lea.vmem [#allocation4], %s1584
    %v1586 = vld [vmem:[%s1585] sm:$0xff]
    %v1587 = vld [vmem:[%s1585 + $0x8] sm:$0xff]
    %v1588 = vld [vmem:[%s1585 + $0x10] sm:$0xff]
    %v1589 = vld [vmem:[%s1585 + $0x18] sm:$0xff]
    %1590 = vmatpush.msra.mxu0 %v458
    %1591 = vmatpush.msra.mxu0 %v454
    %1592 = vmatpush.msra.mxu0 %v450
    %1593 = vmatpush.msra.mxu0 %v446
    %1594 = vmatpush.msra.mxu0 %v442
    %1595 = vmatpush.msra.mxu0 %v438
    %1596 = vmatpush.msra.mxu0 %v434
    %1597 = vmatpush.msra.mxu0 %v430
    %1598 = vmatpush.msra.mxu0 %v426
    %1599 = vmatpush.msra.mxu0 %v422
    %1600 = vmatpush.msra.mxu0 %v418
    %1601 = vmatpush.msra.mxu0 %v414
    %1602 = vmatpush.msra.mxu0 %v410
    %1603 = vmatpush.msra.mxu0 %v406
    %1604 = vmatpush.msra.mxu0 %v402
    %1605 = vmatpush.msra.mxu0 %v398
    %1606 = vmatmul.f32.gmra.mxu0 %v1581
    %v1607 = vpop.f32.mrf.mxu0
    %v1608 = vadd.f32 0.0, %v1607
    %1609 = vdwg.mxu0
    %1610 = vmatpush.msra.mxu0 %v459
    %1611 = vmatpush.msra.mxu0 %v455
    %1612 = vmatpush.msra.mxu0 %v451
    %1613 = vmatpush.msra.mxu0 %v447
    %1614 = vmatpush.msra.mxu0 %v443
    %1615 = vmatpush.msra.mxu0 %v439
    %1616 = vmatpush.msra.mxu0 %v435
    %1617 = vmatpush.msra.mxu0 %v431
    %1618 = vmatpush.msra.mxu0 %v427
    %1619 = vmatpush.msra.mxu0 %v423
    %1620 = vmatpush.msra.mxu0 %v419
    %1621 = vmatpush.msra.mxu0 %v415
    %1622 = vmatpush.msra.mxu0 %v411
    %1623 = vmatpush.msra.mxu0 %v407
    %1624 = vmatpush.msra.mxu0 %v403
    %1625 = vmatpush.msra.mxu0 %v399
    %1626 = vmatmul.f32.gmra.mxu0 %v1581
    %v1627 = vpop.f32.mrf.mxu0
    %v1628 = vadd.f32 0.0, %v1627
    %1629 = vdwg.mxu0
    %1630 = vmatpush.msra.mxu0 %v460
    %1631 = vmatpush.msra.mxu0 %v456
    %1632 = vmatpush.msra.mxu0 %v452
    %1633 = vmatpush.msra.mxu0 %v448
    %1634 = vmatpush.msra.mxu0 %v444
    %1635 = vmatpush.msra.mxu0 %v440
    %1636 = vmatpush.msra.mxu0 %v436
    %1637 = vmatpush.msra.mxu0 %v432
    %1638 = vmatpush.msra.mxu0 %v428
    %1639 = vmatpush.msra.mxu0 %v424
    %1640 = vmatpush.msra.mxu0 %v420
    %1641 = vmatpush.msra.mxu0 %v416
    %1642 = vmatpush.msra.mxu0 %v412
    %1643 = vmatpush.msra.mxu0 %v408
    %1644 = vmatpush.msra.mxu0 %v404
    %1645 = vmatpush.msra.mxu0 %v400
    %1646 = vmatmul.f32.gmra.mxu0 %v1581
    %v1647 = vpop.f32.mrf.mxu0
    %v1648 = vadd.f32 0.0, %v1647
    %1649 = vdwg.mxu0
    %1650 = vmatpush.msra.mxu0 %v461
    %1651 = vmatpush.msra.mxu0 %v457
    %1652 = vmatpush.msra.mxu0 %v453
    %1653 = vmatpush.msra.mxu0 %v449
    %1654 = vmatpush.msra.mxu0 %v445
    %1655 = vmatpush.msra.mxu0 %v441
    %1656 = vmatpush.msra.mxu0 %v437
    %1657 = vmatpush.msra.mxu0 %v433
    %1658 = vmatpush.msra.mxu0 %v429
    %1659 = vmatpush.msra.mxu0 %v425
    %1660 = vmatpush.msra.mxu0 %v421
    %1661 = vmatpush.msra.mxu0 %v417
    %1662 = vmatpush.msra.mxu0 %v413
    %1663 = vmatpush.msra.mxu0 %v409
    %1664 = vmatpush.msra.mxu0 %v405
    %1665 = vmatpush.msra.mxu0 %v401
    %1666 = vmatmul.f32.gmra.mxu0 %v1581
    %v1667 = vpop.f32.mrf.mxu0
    %v1668 = vadd.f32 0.0, %v1667
    %1669 = vdwg.mxu0
    %v1670 = vadd.f32 %v1586, %v1608
    %v1671 = vadd.f32 %v1587, %v1628
    %v1672 = vadd.f32 %v1588, %v1648
    %v1673 = vadd.f32 %v1589, %v1668
    %v1674 = vxor.u32 %v1670, 2147483648
    %v1675 = vmul.f32 %v1674, 1.442695
    %v1676 = vpow.pop %v1675
    %v1677 = vadd.f32 %v1676, 1.0
    %v1678 = vrcp.pop %v1677
    %v1679 = vmul.f32 %v1677, %v1678
    %v1680 = vsub.f32 1.0, %v1679
    %v1681 = vmul.f32 %v1678, %v1680
    %v1682 = vadd.f32 %v1678, %v1681
    %vm1683 = vweird.f32 %v1677
    %vm1684 = vweird.f32 %v1678
    %vm1685 = vmor %vm1683, %vm1684
    %v1686 = vsel %vm1685, %v1678, %v1682
    %v1687 = vand.u32 2147483647, %v1677
    %vm1688 = vcmp.eq.f32.partialorder %v1687, 8.507059e+37
    %v1689 = vand.u32 %v1677, 2147483648
    %v1690 = vor.u32 1.1754944e-38, %v1689
    %v1691 = vsel %vm1688, %v1690, %v1686
    %v1692 = vmul.f32 1.0, %v1691
    %v1693 = vxor.u32 %v1671, 2147483648
    %v1694 = vmul.f32 %v1693, 1.442695
    %v1695 = vpow.pop %v1694
    %v1696 = vadd.f32 %v1695, 1.0
    %v1697 = vrcp.pop %v1696
    %v1698 = vmul.f32 %v1696, %v1697
    %v1699 = vsub.f32 1.0, %v1698
    %v1700 = vmul.f32 %v1697, %v1699
    %v1701 = vadd.f32 %v1697, %v1700
    %vm1702 = vweird.f32 %v1696
    %vm1703 = vweird.f32 %v1697
    %vm1704 = vmor %vm1702, %vm1703
    %v1705 = vsel %vm1704, %v1697, %v1701
    %v1706 = vand.u32 2147483647, %v1696
    %vm1707 = vcmp.eq.f32.partialorder %v1706, 8.507059e+37
    %v1708 = vand.u32 %v1696, 2147483648
    %v1709 = vor.u32 1.1754944e-38, %v1708
    %v1710 = vsel %vm1707, %v1709, %v1705
    %v1711 = vmul.f32 1.0, %v1710
    %v1712 = vtanh.pop %v1672
    %v1713 = vxor.u32 %v1673, 2147483648
    %v1714 = vmul.f32 %v1713, 1.442695
    %v1715 = vpow.pop %v1714
    %v1716 = vadd.f32 %v1715, 1.0
    %v1717 = vrcp.pop %v1716
    %v1718 = vmul.f32 %v1716, %v1717
    %v1719 = vsub.f32 1.0, %v1718
    %v1720 = vmul.f32 %v1717, %v1719
    %v1721 = vadd.f32 %v1717, %v1720
    %vm1722 = vweird.f32 %v1716
    %vm1723 = vweird.f32 %v1717
    %vm1724 = vmor %vm1722, %vm1723
    %v1725 = vsel %vm1724, %v1717, %v1721
    %v1726 = vand.u32 2147483647, %v1716
    %vm1727 = vcmp.eq.f32.partialorder %v1726, 8.507059e+37
    %v1728 = vand.u32 %v1716, 2147483648
    %v1729 = vor.u32 1.1754944e-38, %v1728
    %v1730 = vsel %vm1727, %v1729, %v1725
    %v1731 = vmul.f32 1.0, %v1730
    %v1732 = vmul.f32 %v1711, %v1582
    %v1733 = vmul.f32 %v1692, %v1712
    %v1734 = vadd.f32 %v1732, %v1733
    %v1735 = vtanh.pop %v1734
    %v1736 = vmul.f32 %v1731, %v1735
    %1737 = vst [vmem:[#allocation3] sm:$0xff] %v1734
    %1738 = vst [vmem:[#allocation2] sm:$0xff] %v1736
    %s1739 = scalar_lea.vmem [#allocation16], 56
    %1740 = vst [vmem:[%s1739] sm:$0xff] %v1736
    %v1741 = vld [vmem:[#allocation2] sm:$0xff]
    %1742 = vst [vmem:[#allocation17] sm:$0xff] %v1741
    %v1743 = vld [vmem:[#allocation3] sm:$0xff]
    %1744 = vst [vmem:[#allocation19] sm:$0xff] %v1743
    // Predicated region
    $region50: #{tpu_custom_call.1} parent=1 // pred_check
      _
    $region51: #{tpu_custom_call.1} parent=1 // pred_check_branch
      %1746 = sbr.rel (0) target = $region53
    $region52: #{tpu_custom_call.1} parent=1 // pred_region
      %1748 = vsyncadd [#allocation7], 0
      %s1749 = sshll.u32 [#allocation16], 4
      %s1750 = int_to_ptr.vmem [resolvable:$true] %s1749
      %s1751 = sshll.u32 %s6, 4
      %s1752 = int_to_ptr.hbm [resolvable:$true] %s1751
      %1757 = dma.vmem_to_hbm [thread:$0]  %s1750, 1024, %s1752, [#allocation7], 128, 128, 8
    $region53: #{tpu_custom_call.1} parent=1 // pred_fallthru
      _
    // Predicated region
    $region54: #{tpu_custom_call.1} parent=1 // pred_check
      _
    $region55: #{tpu_custom_call.1} parent=1 // pred_check_branch
      %1759 = sbr.rel (0) target = $region57
    $region56: #{tpu_custom_call.1} parent=1 // pred_region
      %1761 = vsyncadd [#allocation18], 0
      %s1763 = sshll.u32 [#allocation17], 4
      %s1764 = int_to_ptr.vmem [resolvable:$true] %s1763
      %s1765 = sshll.u32 %s7, 4
      %s1766 = int_to_ptr.hbm [resolvable:$true] %s1765
      %1768 = dma.vmem_to_hbm [thread:$0]  %s1764, 128, %s1766, [#allocation18]
    $region57: #{tpu_custom_call.1} parent=1 // pred_fallthru
      _
    // Predicated region
    $region58: #{tpu_custom_call.1} parent=1 // pred_check
      _
    $region59: #{tpu_custom_call.1} parent=1 // pred_check_branch
      %1770 = sbr.rel (0) target = $region61
    $region60: #{tpu_custom_call.1} parent=1 // pred_region
      %1772 = vsyncadd [#allocation18], 0
      %s1774 = sshll.u32 [#allocation19], 4
      %s1775 = int_to_ptr.vmem [resolvable:$true] %s1774
      %s1776 = sshll.u32 %s8, 4
      %s1777 = int_to_ptr.hbm [resolvable:$true] %s1776
      %1779 = dma.vmem_to_hbm [thread:$0]  %s1775, 128, %s1777, [#allocation18]
    $region61: #{tpu_custom_call.1} parent=1 // pred_fallthru
      _
    // Predicated region
    $region62: #{tpu_custom_call.1} parent=1 // pred_check
      _
    $region63: #{tpu_custom_call.1} parent=1 // pred_check_branch
      %1781 = sbr.rel (0) target = $region65
    $region64: #{tpu_custom_call.1} parent=1 // pred_region
      %1783 = dma.done [#allocation7], 1024
    $region65: #{tpu_custom_call.1} parent=1 // pred_fallthru
      _
    // Predicated region
    $region66: #{tpu_custom_call.1} parent=1 // pred_check
      _
    $region67: #{tpu_custom_call.1} parent=1 // pred_check_branch
      %1785 = sbr.rel (0) target = $region69
    $region68: #{tpu_custom_call.1} parent=1 // pred_region
      %1787 = dma.done [#allocation18], 128
    $region69: #{tpu_custom_call.1} parent=1 // pred_fallthru
      _
    // Predicated region
    $region70: #{tpu_custom_call.1} parent=1 // pred_check
      _
    $region71: #{tpu_custom_call.1} parent=1 // pred_check_branch
      %1789 = sbr.rel (0) target = $region73
    $region72: #{tpu_custom_call.1} parent=1 // pred_region
      %1791 = dma.done [#allocation18], 128
    $region73: #{tpu_custom_call.1} parent=1 // pred_fallthru
      _
    %1792 = vsyncpa [#allocation6], 1
    %1793 = vsyncpa [#allocation9], 1
    %1794 = vsyncpa [#allocation12], 1
    %1795 = vsyncpa [#allocation15], 1
    %1796 = vsyncpa [#allocation7], 1
    %1797 = vsyncpa [#allocation18], 1

</llo_original>
